<compile_context>
chip_gen: v7x
topology: tpu7x:2x2x1
jax: 0.10.0
libtpu: 0.0.40
codegen_flags: <defaults>
</compile_context>

<pallas_src>
import functools

import numpy as np
import jax
import jax.numpy as jnp
from jax.experimental import pallas as pl
from jax.experimental.pallas import tpu as pltpu


def _round_up(x, m):
    return (x + m - 1) // m * m


def _prompt_encoder_kernel(cx_ref, cy_ref, lab_ref, pp_ref, esin_ref, ecos_ref,
                           osin_ref, ocos_ref, *, n_points: int):
    """One block of TB batch rows per grid step.

    cx_ref, cy_ref : (TB, M)  normalized x / y coords; M = N points + 2 box corners
    lab_ref        : (TB, N)  int32 point labels in {-1, 0, 1}
    pp_ref         : (3, F)   rows = [4*pi*g0, 4*pi*g1, -2*pi*(g0+g1)]
    esin_ref       : (4, F)   sin-half emb rows, pre-scaled by 1/(N+1):
                              [not_a_point, pe0, pe1, 0.5*(pe2+pe3)]
    ecos_ref       : (4, F)   cos-half emb rows, same layout
    osin_ref       : (TB, F)  sin half of the output
    ocos_ref       : (TB, F)  cos half of the output
    """
    N = n_points
    M = N + 2
    inv = 1.0 / float(N + 1)

    gx = pp_ref[0:1, :]          # (1, F)
    gy = pp_ref[1:2, :]          # (1, F)
    bias = pp_ref[2:3, :]        # (1, F)

    cx = cx_ref[...]             # (TB, M)
    cy = cy_ref[...]             # (TB, M)
    TB = cx.shape[0]
    F = gx.shape[1]

    # Weighted accumulation over the M prompt rows of sin/cos random-Fourier PE.
    # Point rows carry weight 1/(N+1); the two box corners carry 0.5/(N+1)
    # (box-corner mean folded with the final sequence mean).  The projection is
    # two broadcast-FMAs on the VPU; sin/cos go to the EUP (the true bottleneck).
    acc_sin = jnp.zeros((TB, F), jnp.float32)
    acc_cos = jnp.zeros((TB, F), jnp.float32)
    for m in range(M):
        w_m = inv if m < N else 0.5 * inv
        proj = cx[:, m:m + 1] * gx + cy[:, m:m + 1] * gy + bias   # (TB, F)
        acc_sin = acc_sin + w_m * jnp.sin(proj)
        acc_cos = acc_cos + w_m * jnp.cos(proj)

    # Label-conditioned adds collapse to counts (only the row-sum is consumed).
    labels = lab_ref[...]                                          # (TB, N) int32
    c_neg = jnp.sum(jnp.where(labels == -1, 1.0, 0.0), axis=1, keepdims=True)   # (TB, 1)
    c_pos = jnp.sum(jnp.where(labels == 1, 1.0, 0.0), axis=1, keepdims=True)
    c_zero = jnp.sum(jnp.where(labels == 0, 1.0, 0.0), axis=1, keepdims=True)

    # Embedding rows are pre-scaled by 1/(N+1); row 3 is the constant box-corner term.
    add_sin = (c_neg * esin_ref[0:1, :] + c_pos * esin_ref[1:2, :]
               + c_zero * esin_ref[2:3, :] + esin_ref[3:4, :])     # (TB, F)
    add_cos = (c_neg * ecos_ref[0:1, :] + c_pos * ecos_ref[1:2, :]
               + c_zero * ecos_ref[2:3, :] + ecos_ref[3:4, :])

    osin_ref[...] = acc_sin + add_sin
    ocos_ref[...] = acc_cos + add_cos


def sam_prompt_encoder_forward(coords, labels, boxes, gauss, emb_table,
                               input_image_size):
    """JAX wrapper reproducing SAMPromptEncoder.forward(points=(coords, labels), boxes=boxes).

    coords:(B,N,2) labels:(B,N) boxes:(B,4) gauss:(2,F) emb_table:(5,C=2F) -> (B,1,C)
    """
    B, N, _ = coords.shape
    F = gauss.shape[1]
    C = emb_table.shape[1]
    assert C == 2 * F, (C, F)
    H, W = input_image_size
    M = N + 2

    # --- glue: normalize coords, split into lane-major x / y, append box corners ---
    pts = coords.astype(jnp.float32) + 0.5
    px = pts[..., 0] / W                                   # (B, N)
    py = pts[..., 1] / H
    box_c = (boxes.astype(jnp.float32) + 0.5).reshape(B, 2, 2)
    bx = box_c[..., 0] / W                                 # (B, 2)
    by = box_c[..., 1] / H
    cx = jnp.concatenate([px, bx], axis=1)                 # (B, M)
    cy = jnp.concatenate([py, by], axis=1)                 # (B, M)
    labels_i = labels.astype(jnp.int32)                    # (B, N)

    # --- fold (2c-1) affine and 2*pi into the gaussian matrix (constants only) ---
    two_pi = 2.0 * np.pi
    g0 = gauss[0].astype(jnp.float32)
    g1 = gauss[1].astype(jnp.float32)
    pp = jnp.stack([2.0 * two_pi * g0,
                    2.0 * two_pi * g1,
                    -two_pi * (g0 + g1)], axis=0)          # (3, F)

    # --- split emb table into sin/cos halves, pre-scaled by 1/(N+1); row3 = box const ---
    inv = 1.0 / (N + 1)
    e = emb_table.astype(jnp.float32)
    emb_sin = jnp.stack([e[0, :F] * inv, e[1, :F] * inv, e[2, :F] * inv,
                         0.5 * inv * (e[3, :F] + e[4, :F])], axis=0)   # (4, F)
    emb_cos = jnp.stack([e[0, F:] * inv, e[1, F:] * inv, e[2, F:] * inv,
                         0.5 * inv * (e[3, F:] + e[4, F:])], axis=0)   # (4, F)

    # --- batch-collapsed grid: TB rows per step, pad B up to a multiple of TB ---
    TB = min(64, _round_up(B, 8))
    B_pad = _round_up(B, TB)
    if B_pad != B:
        cx = jnp.pad(cx, ((0, B_pad - B), (0, 0)))
        cy = jnp.pad(cy, ((0, B_pad - B), (0, 0)))
        labels_i = jnp.pad(labels_i, ((0, B_pad - B), (0, 0)), constant_values=2)

    kernel = functools.partial(_prompt_encoder_kernel, n_points=N)
    out_sin, out_cos = pl.pallas_call(
        kernel,
        out_shape=(jax.ShapeDtypeStruct((B_pad, F), jnp.float32),
                   jax.ShapeDtypeStruct((B_pad, F), jnp.float32)),
        grid_spec=pltpu.PrefetchScalarGridSpec(
            num_scalar_prefetch=0,
            grid=(B_pad // TB,),
            in_specs=[
                pl.BlockSpec((TB, M), lambda b: (b, 0)),   # cx
                pl.BlockSpec((TB, M), lambda b: (b, 0)),   # cy
                pl.BlockSpec((TB, N), lambda b: (b, 0)),   # labels
                pl.BlockSpec((3, F), lambda b: (0, 0)),    # projection constants
                pl.BlockSpec((4, F), lambda b: (0, 0)),    # emb sin half
                pl.BlockSpec((4, F), lambda b: (0, 0)),    # emb cos half
            ],
            out_specs=(
                pl.BlockSpec((TB, F), lambda b: (b, 0)),
                pl.BlockSpec((TB, F), lambda b: (b, 0)),
            ),
        ),
        compiler_params=pltpu.CompilerParams(
            dimension_semantics=("parallel",)),
    )(cx, cy, labels_i, pp, emb_sin, emb_cos)

    out = jnp.concatenate([out_sin[:B], out_cos[:B]], axis=-1)      # (B, C)
    return out[:, None, :]                                          # (B, 1, C)


def _reference_forward(coords, labels, boxes, gauss, emb_table, input_image_size):
    """Pure-JAX reference mirroring the PyTorch module (for verification)."""
    B, N, _ = coords.shape
    H, W = input_image_size

    def pe_encoding(c):
        c = 2.0 * c - 1.0
        c = c @ gauss
        c = 2.0 * np.pi * c
        return jnp.concatenate([jnp.sin(c), jnp.cos(c)], axis=-1)

    # points
    pts = coords + 0.5
    pts = pts.at[..., 0].divide(W).at[..., 1].divide(H)
    point_embedding = pe_encoding(pts)                               # (B, N, C)
    lab = labels[..., None]
    add = jnp.where(lab == -1, emb_table[0],
          jnp.where(lab == 1, emb_table[1],
          jnp.where(lab == 0, emb_table[2], 0.0)))
    point_embedding = point_embedding + add

    # boxes
    bx = (boxes + 0.5).reshape(B, 2, 2)
    bx = bx.at[..., 0].divide(W).at[..., 1].divide(H)
    corner = pe_encoding(bx)                                         # (B, 2, C)
    corner = corner.at[:, 0, :].add(emb_table[3]).at[:, 1, :].add(emb_table[4])
    box_embedding = corner.mean(axis=1, keepdims=True)               # (B, 1, C)

    combined = jnp.concatenate([point_embedding, box_embedding], axis=1)
    return combined.mean(axis=1, keepdims=True)                      # (B, 1, C)


if __name__ == "__main__":
    # small, module-consistent shapes
    B, N = 2, 8
    embed_dim = 32
    num_pos_feats = embed_dim // 2
    input_image_size = (64, 64)       # (H, W)
    image_embedding_size = (4, 4)     # unused by this forward path

    key = jax.random.PRNGKey(0)
    k_gauss, k_emb, k_pts, k_lab, k_box = jax.random.split(key, 5)

    # deterministic synthetic parameters (shapes match nn.Embedding(1, C) / randn((2, F)))
    scale = 1.0
    gauss = scale * jax.random.normal(k_gauss, (2, num_pos_feats), dtype=jnp.float32)
    # rows: [not_a_point_embed, point_embeddings[0..3]]
    emb_table = jax.random.normal(k_emb, (5, embed_dim), dtype=jnp.float32)

    # deterministic synthetic inputs
    coords = jax.random.uniform(k_pts, (B, N, 2), dtype=jnp.float32,
                                minval=0.0, maxval=63.0)
    labels = jax.random.randint(k_lab, (B, N), minval=-1, maxval=2).astype(jnp.float32)
    boxes = jnp.sort(
        jax.random.uniform(k_box, (B, 4), dtype=jnp.float32, minval=0.0, maxval=63.0),
        axis=-1)

    out = sam_prompt_encoder_forward(coords, labels, boxes, gauss, emb_table,
                                     input_image_size)
    out = jax.block_until_ready(out)

    ref = _reference_forward(coords, labels, boxes, gauss, emb_table,
                             input_image_size)
    assert out.shape == (B, 1, embed_dim), out.shape
    assert jnp.allclose(out, ref, atol=2e-4, rtol=2e-4), (
        f"max abs err {jnp.max(jnp.abs(out - ref))}")

    print("KERNEL_OK")
</pallas_src>

<mosaic_0001>
module attributes {stable_mosaic.version = 11 : i64} {
  func.func @_prompt_encoder_kernel(%arg0: i32, %arg1: memref<8x10xf32, #tpu.memory_space<vmem>>, %arg2: memref<8x10xf32, #tpu.memory_space<vmem>>, %arg3: memref<8x8xi32, #tpu.memory_space<vmem>>, %arg4: memref<3x16xf32, #tpu.memory_space<vmem>>, %arg5: memref<4x16xf32, #tpu.memory_space<vmem>>, %arg6: memref<4x16xf32, #tpu.memory_space<vmem>>, %arg7: memref<8x16xf32, #tpu.memory_space<vmem>>, %arg8: memref<8x16xf32, #tpu.memory_space<vmem>>) attributes {dimension_semantics = [#tpu.dimension_semantics<parallel>], iteration_bounds = array<i64: 1>, scalar_prefetch = 0 : i64, scratch_operands = 0 : i64, tpu.core_type = #tpu.core_type<tc>, window_params = [{transform_indices = @transform_0, window_bounds = array<i64: 8, 10>}, {transform_indices = @transform_1, window_bounds = array<i64: 8, 10>}, {transform_indices = @transform_2, window_bounds = array<i64: 8, 8>}, {pipeline_mode = #tpu.pipeline_mode<synchronous>, transform_indices = @transform_3, window_bounds = array<i64: 3, 16>}, {pipeline_mode = #tpu.pipeline_mode<synchronous>, transform_indices = @transform_4, window_bounds = array<i64: 4, 16>}, {pipeline_mode = #tpu.pipeline_mode<synchronous>, transform_indices = @transform_5, window_bounds = array<i64: 4, 16>}, {transform_indices = @transform_6, window_bounds = array<i64: 8, 16>}, {transform_indices = @transform_7, window_bounds = array<i64: 8, 16>}]} {
    %c0 = arith.constant 0 : index
    %c0_0 = arith.constant 0 : index
    %0 = vector.load %arg4[%c0, %c0_0] : memref<3x16xf32, #tpu.memory_space<vmem>>, vector<1x16xf32>
    %c1 = arith.constant 1 : index
    %c0_1 = arith.constant 0 : index
    %1 = vector.load %arg4[%c1, %c0_1] : memref<3x16xf32, #tpu.memory_space<vmem>>, vector<1x16xf32>
    %c2 = arith.constant 2 : index
    %c0_2 = arith.constant 0 : index
    %2 = vector.load %arg4[%c2, %c0_2] : memref<3x16xf32, #tpu.memory_space<vmem>>, vector<1x16xf32>
    %c0_3 = arith.constant 0 : index
    %c0_4 = arith.constant 0 : index
    %3 = vector.load %arg1[%c0_3, %c0_4] : memref<8x10xf32, #tpu.memory_space<vmem>>, vector<8x10xf32>
    %c0_5 = arith.constant 0 : index
    %c0_6 = arith.constant 0 : index
    %4 = vector.load %arg2[%c0_5, %c0_6] : memref<8x10xf32, #tpu.memory_space<vmem>>, vector<8x10xf32>
    %cst = arith.constant 0.000000e+00 : f32
    %5 = vector.broadcast %cst : f32 to vector<8x16xf32>
    %cst_7 = arith.constant 0.000000e+00 : f32
    %6 = vector.broadcast %cst_7 : f32 to vector<8x16xf32>
    %7 = vector.extract_strided_slice %3 {offsets = [0, 0], sizes = [8, 1], strides = [1, 1]} : vector<8x10xf32> to vector<8x1xf32>
    %8 = vector.broadcast %7 : vector<8x1xf32> to vector<8x16xf32>
    %9 = vector.broadcast %0 : vector<1x16xf32> to vector<8x16xf32>
    %10 = arith.mulf %8, %9 : vector<8x16xf32>
    %11 = vector.extract_strided_slice %4 {offsets = [0, 0], sizes = [8, 1], strides = [1, 1]} : vector<8x10xf32> to vector<8x1xf32>
    %12 = vector.broadcast %11 : vector<8x1xf32> to vector<8x16xf32>
    %13 = vector.broadcast %1 : vector<1x16xf32> to vector<8x16xf32>
    %14 = arith.mulf %12, %13 : vector<8x16xf32>
    %15 = arith.addf %10, %14 : vector<8x16xf32>
    %16 = vector.broadcast %2 : vector<1x16xf32> to vector<8x16xf32>
    %17 = arith.addf %15, %16 : vector<8x16xf32>
    %18 = math.sin %17 : vector<8x16xf32>
    %cst_8 = arith.constant 0.111111112 : f32
    %19 = vector.broadcast %cst_8 : f32 to vector<8x16xf32>
    %20 = arith.mulf %19, %18 : vector<8x16xf32>
    %21 = arith.addf %5, %20 : vector<8x16xf32>
    %22 = math.cos %17 : vector<8x16xf32>
    %cst_9 = arith.constant 0.111111112 : f32
    %23 = vector.broadcast %cst_9 : f32 to vector<8x16xf32>
    %24 = arith.mulf %23, %22 : vector<8x16xf32>
    %25 = arith.addf %6, %24 : vector<8x16xf32>
    %26 = vector.extract_strided_slice %3 {offsets = [0, 1], sizes = [8, 1], strides = [1, 1]} : vector<8x10xf32> to vector<8x1xf32>
    %27 = vector.broadcast %26 : vector<8x1xf32> to vector<8x16xf32>
    %28 = vector.broadcast %0 : vector<1x16xf32> to vector<8x16xf32>
    %29 = arith.mulf %27, %28 : vector<8x16xf32>
    %30 = vector.extract_strided_slice %4 {offsets = [0, 1], sizes = [8, 1], strides = [1, 1]} : vector<8x10xf32> to vector<8x1xf32>
    %31 = vector.broadcast %30 : vector<8x1xf32> to vector<8x16xf32>
    %32 = vector.broadcast %1 : vector<1x16xf32> to vector<8x16xf32>
    %33 = arith.mulf %31, %32 : vector<8x16xf32>
    %34 = arith.addf %29, %33 : vector<8x16xf32>
    %35 = vector.broadcast %2 : vector<1x16xf32> to vector<8x16xf32>
    %36 = arith.addf %34, %35 : vector<8x16xf32>
    %37 = math.sin %36 : vector<8x16xf32>
    %cst_10 = arith.constant 0.111111112 : f32
    %38 = vector.broadcast %cst_10 : f32 to vector<8x16xf32>
    %39 = arith.mulf %38, %37 : vector<8x16xf32>
    %40 = arith.addf %21, %39 : vector<8x16xf32>
    %41 = math.cos %36 : vector<8x16xf32>
    %cst_11 = arith.constant 0.111111112 : f32
    %42 = vector.broadcast %cst_11 : f32 to vector<8x16xf32>
    %43 = arith.mulf %42, %41 : vector<8x16xf32>
    %44 = arith.addf %25, %43 : vector<8x16xf32>
    %45 = vector.extract_strided_slice %3 {offsets = [0, 2], sizes = [8, 1], strides = [1, 1]} : vector<8x10xf32> to vector<8x1xf32>
    %46 = vector.broadcast %45 : vector<8x1xf32> to vector<8x16xf32>
    %47 = vector.broadcast %0 : vector<1x16xf32> to vector<8x16xf32>
    %48 = arith.mulf %46, %47 : vector<8x16xf32>
    %49 = vector.extract_strided_slice %4 {offsets = [0, 2], sizes = [8, 1], strides = [1, 1]} : vector<8x10xf32> to vector<8x1xf32>
    %50 = vector.broadcast %49 : vector<8x1xf32> to vector<8x16xf32>
    %51 = vector.broadcast %1 : vector<1x16xf32> to vector<8x16xf32>
    %52 = arith.mulf %50, %51 : vector<8x16xf32>
    %53 = arith.addf %48, %52 : vector<8x16xf32>
    %54 = vector.broadcast %2 : vector<1x16xf32> to vector<8x16xf32>
    %55 = arith.addf %53, %54 : vector<8x16xf32>
    %56 = math.sin %55 : vector<8x16xf32>
    %cst_12 = arith.constant 0.111111112 : f32
    %57 = vector.broadcast %cst_12 : f32 to vector<8x16xf32>
    %58 = arith.mulf %57, %56 : vector<8x16xf32>
    %59 = arith.addf %40, %58 : vector<8x16xf32>
    %60 = math.cos %55 : vector<8x16xf32>
    %cst_13 = arith.constant 0.111111112 : f32
    %61 = vector.broadcast %cst_13 : f32 to vector<8x16xf32>
    %62 = arith.mulf %61, %60 : vector<8x16xf32>
    %63 = arith.addf %44, %62 : vector<8x16xf32>
    %64 = vector.extract_strided_slice %3 {offsets = [0, 3], sizes = [8, 1], strides = [1, 1]} : vector<8x10xf32> to vector<8x1xf32>
    %65 = vector.broadcast %64 : vector<8x1xf32> to vector<8x16xf32>
    %66 = vector.broadcast %0 : vector<1x16xf32> to vector<8x16xf32>
    %67 = arith.mulf %65, %66 : vector<8x16xf32>
    %68 = vector.extract_strided_slice %4 {offsets = [0, 3], sizes = [8, 1], strides = [1, 1]} : vector<8x10xf32> to vector<8x1xf32>
    %69 = vector.broadcast %68 : vector<8x1xf32> to vector<8x16xf32>
    %70 = vector.broadcast %1 : vector<1x16xf32> to vector<8x16xf32>
    %71 = arith.mulf %69, %70 : vector<8x16xf32>
    %72 = arith.addf %67, %71 : vector<8x16xf32>
    %73 = vector.broadcast %2 : vector<1x16xf32> to vector<8x16xf32>
    %74 = arith.addf %72, %73 : vector<8x16xf32>
    %75 = math.sin %74 : vector<8x16xf32>
    %cst_14 = arith.constant 0.111111112 : f32
    %76 = vector.broadcast %cst_14 : f32 to vector<8x16xf32>
    %77 = arith.mulf %76, %75 : vector<8x16xf32>
    %78 = arith.addf %59, %77 : vector<8x16xf32>
    %79 = math.cos %74 : vector<8x16xf32>
    %cst_15 = arith.constant 0.111111112 : f32
    %80 = vector.broadcast %cst_15 : f32 to vector<8x16xf32>
    %81 = arith.mulf %80, %79 : vector<8x16xf32>
    %82 = arith.addf %63, %81 : vector<8x16xf32>
    %83 = vector.extract_strided_slice %3 {offsets = [0, 4], sizes = [8, 1], strides = [1, 1]} : vector<8x10xf32> to vector<8x1xf32>
    %84 = vector.broadcast %83 : vector<8x1xf32> to vector<8x16xf32>
    %85 = vector.broadcast %0 : vector<1x16xf32> to vector<8x16xf32>
    %86 = arith.mulf %84, %85 : vector<8x16xf32>
    %87 = vector.extract_strided_slice %4 {offsets = [0, 4], sizes = [8, 1], strides = [1, 1]} : vector<8x10xf32> to vector<8x1xf32>
    %88 = vector.broadcast %87 : vector<8x1xf32> to vector<8x16xf32>
    %89 = vector.broadcast %1 : vector<1x16xf32> to vector<8x16xf32>
    %90 = arith.mulf %88, %89 : vector<8x16xf32>
    %91 = arith.addf %86, %90 : vector<8x16xf32>
    %92 = vector.broadcast %2 : vector<1x16xf32> to vector<8x16xf32>
    %93 = arith.addf %91, %92 : vector<8x16xf32>
    %94 = math.sin %93 : vector<8x16xf32>
    %cst_16 = arith.constant 0.111111112 : f32
    %95 = vector.broadcast %cst_16 : f32 to vector<8x16xf32>
    %96 = arith.mulf %95, %94 : vector<8x16xf32>
    %97 = arith.addf %78, %96 : vector<8x16xf32>
    %98 = math.cos %93 : vector<8x16xf32>
    %cst_17 = arith.constant 0.111111112 : f32
    %99 = vector.broadcast %cst_17 : f32 to vector<8x16xf32>
    %100 = arith.mulf %99, %98 : vector<8x16xf32>
    %101 = arith.addf %82, %100 : vector<8x16xf32>
    %102 = vector.extract_strided_slice %3 {offsets = [0, 5], sizes = [8, 1], strides = [1, 1]} : vector<8x10xf32> to vector<8x1xf32>
    %103 = vector.broadcast %102 : vector<8x1xf32> to vector<8x16xf32>
    %104 = vector.broadcast %0 : vector<1x16xf32> to vector<8x16xf32>
    %105 = arith.mulf %103, %104 : vector<8x16xf32>
    %106 = vector.extract_strided_slice %4 {offsets = [0, 5], sizes = [8, 1], strides = [1, 1]} : vector<8x10xf32> to vector<8x1xf32>
    %107 = vector.broadcast %106 : vector<8x1xf32> to vector<8x16xf32>
    %108 = vector.broadcast %1 : vector<1x16xf32> to vector<8x16xf32>
    %109 = arith.mulf %107, %108 : vector<8x16xf32>
    %110 = arith.addf %105, %109 : vector<8x16xf32>
    %111 = vector.broadcast %2 : vector<1x16xf32> to vector<8x16xf32>
    %112 = arith.addf %110, %111 : vector<8x16xf32>
    %113 = math.sin %112 : vector<8x16xf32>
    %cst_18 = arith.constant 0.111111112 : f32
    %114 = vector.broadcast %cst_18 : f32 to vector<8x16xf32>
    %115 = arith.mulf %114, %113 : vector<8x16xf32>
    %116 = arith.addf %97, %115 : vector<8x16xf32>
    %117 = math.cos %112 : vector<8x16xf32>
    %cst_19 = arith.constant 0.111111112 : f32
    %118 = vector.broadcast %cst_19 : f32 to vector<8x16xf32>
    %119 = arith.mulf %118, %117 : vector<8x16xf32>
    %120 = arith.addf %101, %119 : vector<8x16xf32>
    %121 = vector.extract_strided_slice %3 {offsets = [0, 6], sizes = [8, 1], strides = [1, 1]} : vector<8x10xf32> to vector<8x1xf32>
    %122 = vector.broadcast %121 : vector<8x1xf32> to vector<8x16xf32>
    %123 = vector.broadcast %0 : vector<1x16xf32> to vector<8x16xf32>
    %124 = arith.mulf %122, %123 : vector<8x16xf32>
    %125 = vector.extract_strided_slice %4 {offsets = [0, 6], sizes = [8, 1], strides = [1, 1]} : vector<8x10xf32> to vector<8x1xf32>
    %126 = vector.broadcast %125 : vector<8x1xf32> to vector<8x16xf32>
    %127 = vector.broadcast %1 : vector<1x16xf32> to vector<8x16xf32>
    %128 = arith.mulf %126, %127 : vector<8x16xf32>
    %129 = arith.addf %124, %128 : vector<8x16xf32>
    %130 = vector.broadcast %2 : vector<1x16xf32> to vector<8x16xf32>
    %131 = arith.addf %129, %130 : vector<8x16xf32>
    %132 = math.sin %131 : vector<8x16xf32>
    %cst_20 = arith.constant 0.111111112 : f32
    %133 = vector.broadcast %cst_20 : f32 to vector<8x16xf32>
    %134 = arith.mulf %133, %132 : vector<8x16xf32>
    %135 = arith.addf %116, %134 : vector<8x16xf32>
    %136 = math.cos %131 : vector<8x16xf32>
    %cst_21 = arith.constant 0.111111112 : f32
    %137 = vector.broadcast %cst_21 : f32 to vector<8x16xf32>
    %138 = arith.mulf %137, %136 : vector<8x16xf32>
    %139 = arith.addf %120, %138 : vector<8x16xf32>
    %140 = vector.extract_strided_slice %3 {offsets = [0, 7], sizes = [8, 1], strides = [1, 1]} : vector<8x10xf32> to vector<8x1xf32>
    %141 = vector.broadcast %140 : vector<8x1xf32> to vector<8x16xf32>
    %142 = vector.broadcast %0 : vector<1x16xf32> to vector<8x16xf32>
    %143 = arith.mulf %141, %142 : vector<8x16xf32>
    %144 = vector.extract_strided_slice %4 {offsets = [0, 7], sizes = [8, 1], strides = [1, 1]} : vector<8x10xf32> to vector<8x1xf32>
    %145 = vector.broadcast %144 : vector<8x1xf32> to vector<8x16xf32>
    %146 = vector.broadcast %1 : vector<1x16xf32> to vector<8x16xf32>
    %147 = arith.mulf %145, %146 : vector<8x16xf32>
    %148 = arith.addf %143, %147 : vector<8x16xf32>
    %149 = vector.broadcast %2 : vector<1x16xf32> to vector<8x16xf32>
    %150 = arith.addf %148, %149 : vector<8x16xf32>
    %151 = math.sin %150 : vector<8x16xf32>
    %cst_22 = arith.constant 0.111111112 : f32
    %152 = vector.broadcast %cst_22 : f32 to vector<8x16xf32>
    %153 = arith.mulf %152, %151 : vector<8x16xf32>
    %154 = arith.addf %135, %153 : vector<8x16xf32>
    %155 = math.cos %150 : vector<8x16xf32>
    %cst_23 = arith.constant 0.111111112 : f32
    %156 = vector.broadcast %cst_23 : f32 to vector<8x16xf32>
    %157 = arith.mulf %156, %155 : vector<8x16xf32>
    %158 = arith.addf %139, %157 : vector<8x16xf32>
    %159 = vector.extract_strided_slice %3 {offsets = [0, 8], sizes = [8, 1], strides = [1, 1]} : vector<8x10xf32> to vector<8x1xf32>
    %160 = vector.broadcast %159 : vector<8x1xf32> to vector<8x16xf32>
    %161 = vector.broadcast %0 : vector<1x16xf32> to vector<8x16xf32>
    %162 = arith.mulf %160, %161 : vector<8x16xf32>
    %163 = vector.extract_strided_slice %4 {offsets = [0, 8], sizes = [8, 1], strides = [1, 1]} : vector<8x10xf32> to vector<8x1xf32>
    %164 = vector.broadcast %163 : vector<8x1xf32> to vector<8x16xf32>
    %165 = vector.broadcast %1 : vector<1x16xf32> to vector<8x16xf32>
    %166 = arith.mulf %164, %165 : vector<8x16xf32>
    %167 = arith.addf %162, %166 : vector<8x16xf32>
    %168 = vector.broadcast %2 : vector<1x16xf32> to vector<8x16xf32>
    %169 = arith.addf %167, %168 : vector<8x16xf32>
    %170 = math.sin %169 : vector<8x16xf32>
    %cst_24 = arith.constant 0.055555556 : f32
    %171 = vector.broadcast %cst_24 : f32 to vector<8x16xf32>
    %172 = arith.mulf %171, %170 : vector<8x16xf32>
    %173 = arith.addf %154, %172 : vector<8x16xf32>
    %174 = math.cos %169 : vector<8x16xf32>
    %cst_25 = arith.constant 0.055555556 : f32
    %175 = vector.broadcast %cst_25 : f32 to vector<8x16xf32>
    %176 = arith.mulf %175, %174 : vector<8x16xf32>
    %177 = arith.addf %158, %176 : vector<8x16xf32>
    %178 = vector.extract_strided_slice %3 {offsets = [0, 9], sizes = [8, 1], strides = [1, 1]} : vector<8x10xf32> to vector<8x1xf32>
    %179 = vector.broadcast %178 : vector<8x1xf32> to vector<8x16xf32>
    %180 = vector.broadcast %0 : vector<1x16xf32> to vector<8x16xf32>
    %181 = arith.mulf %179, %180 : vector<8x16xf32>
    %182 = vector.extract_strided_slice %4 {offsets = [0, 9], sizes = [8, 1], strides = [1, 1]} : vector<8x10xf32> to vector<8x1xf32>
    %183 = vector.broadcast %182 : vector<8x1xf32> to vector<8x16xf32>
    %184 = vector.broadcast %1 : vector<1x16xf32> to vector<8x16xf32>
    %185 = arith.mulf %183, %184 : vector<8x16xf32>
    %186 = arith.addf %181, %185 : vector<8x16xf32>
    %187 = vector.broadcast %2 : vector<1x16xf32> to vector<8x16xf32>
    %188 = arith.addf %186, %187 : vector<8x16xf32>
    %189 = math.sin %188 : vector<8x16xf32>
    %cst_26 = arith.constant 0.055555556 : f32
    %190 = vector.broadcast %cst_26 : f32 to vector<8x16xf32>
    %191 = arith.mulf %190, %189 : vector<8x16xf32>
    %192 = arith.addf %173, %191 : vector<8x16xf32>
    %193 = math.cos %188 : vector<8x16xf32>
    %cst_27 = arith.constant 0.055555556 : f32
    %194 = vector.broadcast %cst_27 : f32 to vector<8x16xf32>
    %195 = arith.mulf %194, %193 : vector<8x16xf32>
    %196 = arith.addf %177, %195 : vector<8x16xf32>
    %c0_28 = arith.constant 0 : index
    %c0_29 = arith.constant 0 : index
    %197 = vector.load %arg3[%c0_28, %c0_29] : memref<8x8xi32, #tpu.memory_space<vmem>>, vector<8x8xi32>
    %c-1_i32 = arith.constant -1 : i32
    %198 = vector.broadcast %c-1_i32 : i32 to vector<8x8xi32>
    %199 = arith.cmpi eq, %197, %198 : vector<8x8xi32>
    %cst_30 = arith.constant 1.000000e+00 : f32
    %cst_31 = arith.constant 0.000000e+00 : f32
    %200 = vector.broadcast %cst_30 : f32 to vector<8x8xf32>
    %201 = vector.broadcast %cst_31 : f32 to vector<8x8xf32>
    %202 = arith.select %199, %200, %201 : vector<8x8xi1>, vector<8x8xf32>
    %cst_32 = arith.constant dense<0.000000e+00> : vector<8xf32>
    %203 = vector.multi_reduction <add>, %202, %cst_32 [1] : vector<8x8xf32> to vector<8xf32>
    %204 = vector.shape_cast %203 : vector<8xf32> to vector<8x1xf32>
    %c1_i32 = arith.constant 1 : i32
    %205 = vector.broadcast %c1_i32 : i32 to vector<8x8xi32>
    %206 = arith.cmpi eq, %197, %205 : vector<8x8xi32>
    %cst_33 = arith.constant 1.000000e+00 : f32
    %cst_34 = arith.constant 0.000000e+00 : f32
    %207 = vector.broadcast %cst_33 : f32 to vector<8x8xf32>
    %208 = vector.broadcast %cst_34 : f32 to vector<8x8xf32>
    %209 = arith.select %206, %207, %208 : vector<8x8xi1>, vector<8x8xf32>
    %cst_35 = arith.constant dense<0.000000e+00> : vector<8xf32>
    %210 = vector.multi_reduction <add>, %209, %cst_35 [1] : vector<8x8xf32> to vector<8xf32>
    %211 = vector.shape_cast %210 : vector<8xf32> to vector<8x1xf32>
    %c0_i32 = arith.constant 0 : i32
    %212 = vector.broadcast %c0_i32 : i32 to vector<8x8xi32>
    %213 = arith.cmpi eq, %197, %212 : vector<8x8xi32>
    %cst_36 = arith.constant 1.000000e+00 : f32
    %cst_37 = arith.constant 0.000000e+00 : f32
    %214 = vector.broadcast %cst_36 : f32 to vector<8x8xf32>
    %215 = vector.broadcast %cst_37 : f32 to vector<8x8xf32>
    %216 = arith.select %213, %214, %215 : vector<8x8xi1>, vector<8x8xf32>
    %cst_38 = arith.constant dense<0.000000e+00> : vector<8xf32>
    %217 = vector.multi_reduction <add>, %216, %cst_38 [1] : vector<8x8xf32> to vector<8xf32>
    %218 = vector.shape_cast %217 : vector<8xf32> to vector<8x1xf32>
    %c0_39 = arith.constant 0 : index
    %c0_40 = arith.constant 0 : index
    %219 = vector.load %arg5[%c0_39, %c0_40] : memref<4x16xf32, #tpu.memory_space<vmem>>, vector<1x16xf32>
    %220 = vector.broadcast %204 : vector<8x1xf32> to vector<8x16xf32>
    %221 = vector.broadcast %219 : vector<1x16xf32> to vector<8x16xf32>
    %222 = arith.mulf %220, %221 : vector<8x16xf32>
    %c1_41 = arith.constant 1 : index
    %c0_42 = arith.constant 0 : index
    %223 = vector.load %arg5[%c1_41, %c0_42] : memref<4x16xf32, #tpu.memory_space<vmem>>, vector<1x16xf32>
    %224 = vector.broadcast %211 : vector<8x1xf32> to vector<8x16xf32>
    %225 = vector.broadcast %223 : vector<1x16xf32> to vector<8x16xf32>
    %226 = arith.mulf %224, %225 : vector<8x16xf32>
    %227 = arith.addf %222, %226 : vector<8x16xf32>
    %c2_43 = arith.constant 2 : index
    %c0_44 = arith.constant 0 : index
    %228 = vector.load %arg5[%c2_43, %c0_44] : memref<4x16xf32, #tpu.memory_space<vmem>>, vector<1x16xf32>
    %229 = vector.broadcast %218 : vector<8x1xf32> to vector<8x16xf32>
    %230 = vector.broadcast %228 : vector<1x16xf32> to vector<8x16xf32>
    %231 = arith.mulf %229, %230 : vector<8x16xf32>
    %232 = arith.addf %227, %231 : vector<8x16xf32>
    %c3 = arith.constant 3 : index
    %c0_45 = arith.constant 0 : index
    %233 = vector.load %arg5[%c3, %c0_45] : memref<4x16xf32, #tpu.memory_space<vmem>>, vector<1x16xf32>
    %234 = vector.broadcast %233 : vector<1x16xf32> to vector<8x16xf32>
    %235 = arith.addf %232, %234 : vector<8x16xf32>
    %c0_46 = arith.constant 0 : index
    %c0_47 = arith.constant 0 : index
    %236 = vector.load %arg6[%c0_46, %c0_47] : memref<4x16xf32, #tpu.memory_space<vmem>>, vector<1x16xf32>
    %237 = vector.broadcast %204 : vector<8x1xf32> to vector<8x16xf32>
    %238 = vector.broadcast %236 : vector<1x16xf32> to vector<8x16xf32>
    %239 = arith.mulf %237, %238 : vector<8x16xf32>
    %c1_48 = arith.constant 1 : index
    %c0_49 = arith.constant 0 : index
    %240 = vector.load %arg6[%c1_48, %c0_49] : memref<4x16xf32, #tpu.memory_space<vmem>>, vector<1x16xf32>
    %241 = vector.broadcast %211 : vector<8x1xf32> to vector<8x16xf32>
    %242 = vector.broadcast %240 : vector<1x16xf32> to vector<8x16xf32>
    %243 = arith.mulf %241, %242 : vector<8x16xf32>
    %244 = arith.addf %239, %243 : vector<8x16xf32>
    %c2_50 = arith.constant 2 : index
    %c0_51 = arith.constant 0 : index
    %245 = vector.load %arg6[%c2_50, %c0_51] : memref<4x16xf32, #tpu.memory_space<vmem>>, vector<1x16xf32>
    %246 = vector.broadcast %218 : vector<8x1xf32> to vector<8x16xf32>
    %247 = vector.broadcast %245 : vector<1x16xf32> to vector<8x16xf32>
    %248 = arith.mulf %246, %247 : vector<8x16xf32>
    %249 = arith.addf %244, %248 : vector<8x16xf32>
    %c3_52 = arith.constant 3 : index
    %c0_53 = arith.constant 0 : index
    %250 = vector.load %arg6[%c3_52, %c0_53] : memref<4x16xf32, #tpu.memory_space<vmem>>, vector<1x16xf32>
    %251 = vector.broadcast %250 : vector<1x16xf32> to vector<8x16xf32>
    %252 = arith.addf %249, %251 : vector<8x16xf32>
    %253 = arith.addf %192, %235 : vector<8x16xf32>
    %c0_54 = arith.constant 0 : index
    %c0_55 = arith.constant 0 : index
    %254 = vector.load %arg7[%c0_54, %c0_55] : memref<8x16xf32, #tpu.memory_space<vmem>>, vector<8x16xf32>
    tpu.vector_store %arg7[%c0_54, %c0_55], %253 {strides = array<i32>} : memref<8x16xf32, #tpu.memory_space<vmem>>, vector<8x16xf32>,
    %255 = arith.addf %196, %252 : vector<8x16xf32>
    %c0_56 = arith.constant 0 : index
    %c0_57 = arith.constant 0 : index
    %256 = vector.load %arg8[%c0_56, %c0_57] : memref<8x16xf32, #tpu.memory_space<vmem>>, vector<8x16xf32>
    tpu.vector_store %arg8[%c0_56, %c0_57], %255 {strides = array<i32>} : memref<8x16xf32, #tpu.memory_space<vmem>>, vector<8x16xf32>,
    return
  }
  func.func @transform_0(%arg0: i32) -> (i32, i32) {
    %c0_i32 = arith.constant 0 : i32
    %c0_i32_0 = arith.constant 0 : i32
    return %arg0, %c0_i32 : i32, i32
  }
  func.func @transform_1(%arg0: i32) -> (i32, i32) {
    %c0_i32 = arith.constant 0 : i32
    %c0_i32_0 = arith.constant 0 : i32
    return %arg0, %c0_i32 : i32, i32
  }
  func.func @transform_2(%arg0: i32) -> (i32, i32) {
    %c0_i32 = arith.constant 0 : i32
    %c0_i32_0 = arith.constant 0 : i32
    return %arg0, %c0_i32 : i32, i32
  }
  func.func @transform_3(%arg0: i32) -> (i32, i32) {
    %c0_i32 = arith.constant 0 : i32
    %c0_i32_0 = arith.constant 0 : i32
    %c0_i32_1 = arith.constant 0 : i32
    return %c0_i32, %c0_i32_0 : i32, i32
  }
  func.func @transform_4(%arg0: i32) -> (i32, i32) {
    %c0_i32 = arith.constant 0 : i32
    %c0_i32_0 = arith.constant 0 : i32
    %c0_i32_1 = arith.constant 0 : i32
    return %c0_i32, %c0_i32_0 : i32, i32
  }
  func.func @transform_5(%arg0: i32) -> (i32, i32) {
    %c0_i32 = arith.constant 0 : i32
    %c0_i32_0 = arith.constant 0 : i32
    %c0_i32_1 = arith.constant 0 : i32
    return %c0_i32, %c0_i32_0 : i32, i32
  }
  func.func @transform_6(%arg0: i32) -> (i32, i32) {
    %c0_i32 = arith.constant 0 : i32
    %c0_i32_0 = arith.constant 0 : i32
    return %arg0, %c0_i32 : i32, i32
  }
  func.func @transform_7(%arg0: i32) -> (i32, i32) {
    %c0_i32 = arith.constant 0 : i32
    %c0_i32_0 = arith.constant 0 : i32
    return %arg0, %c0_i32 : i32, i32
  }
}

</mosaic_0001>

<llo_original>
// kernel: tpu_custom_call.1
$region0: #{tpu_custom_call.1}
  #allocation0 [shape = 'u32[]', space=smem, size = 0x4, offset = 0x4, fixed_abs, tag = 'smem constant byte address 0x4 - core index']
  #allocation1 [shape = 'u32[144,128]{1,0:T(1,128)}', space=vmem, size = 0x12000, scoped, tag = 'internal scratch']
  %s0 = inlined_call_operand.hbm [shape: f32[8,10], index: 0, kind: input, shape index: {}]
  %s1 = inlined_call_operand.hbm [shape: f32[8,10], index: 1, kind: input, shape index: {}]
  %s2 = inlined_call_operand.hbm [shape: s32[8,8], index: 2, kind: input, shape index: {}]
  %s3 = inlined_call_operand.vmem [shape: f32[3,16], index: 3, kind: input, shape index: {}]
  %s4 = inlined_call_operand.vmem [shape: f32[4,16], index: 4, kind: input, shape index: {}]
  %s5 = inlined_call_operand.vmem [shape: f32[4,16], index: 5, kind: input, shape index: {}]
  %s6 = inlined_call_operand.hbm [shape: f32[8,16], index: 6, kind: output, shape index: {0}]
  %s7 = inlined_call_operand.hbm [shape: f32[8,16], index: 7, kind: output, shape index: {1}]
  %8 = xla_tuple %s6, %s7
  %s9 = sld [smem:[#allocation0]]
  $region54: #{tpu_custom_call.1} parent=0
    _
  %s11 = ssub.s32 1, %s9
  %s12 = scalar_select 0, %s11, %s9
  $region1: #{tpu_custom_call.1} parent=0
    #allocation2 [shape = 'u8[4096]{0}', space=vmem, size = 0x1000, scoped, tag = 'input window, operand 0, single buffered']
    #allocation3 [shape = 's32[1]{0}', space=sflag, size = 0x4, scoped, tag = 'scoped memory for tpu_custom_call.1']
    #allocation4 [shape = 's32[1]{0}', space=sflag, size = 0x4, scoped, tag = 'scoped memory for tpu_custom_call.1']
    #allocation5 [shape = 'u8[4096]{0}', space=vmem, size = 0x1000, scoped, tag = 'input window, operand 1, single buffered']
    #allocation6 [shape = 's32[1]{0}', space=sflag, size = 0x4, scoped, tag = 'scoped memory for tpu_custom_call.1']
    #allocation7 [shape = 'u8[4096]{0}', space=vmem, size = 0x1000, scoped, tag = 'input window, operand 2, single buffered']
    #allocation8 [shape = 'u8[4096]{0}', space=vmem, size = 0x1000, scoped, tag = 'output window, operand 0, single buffered']
    #allocation9 [shape = 'u8[4096]{0}', space=vmem, size = 0x1000, scoped, tag = 'output window, operand 1, single buffered']
    #allocation10 [shape = 's32[1]{0}', space=sflag, size = 0x4, scoped, tag = 'scoped memory for tpu_custom_call.1']
    %13 = vsyncpa [#allocation3], 0
    %14 = vsyncpa [#allocation6], 0
    %15 = vsyncpa [#allocation4], 0
    %16 = vsyncpa [#allocation10], 0
    // Predicated region
    $region2: #{tpu_custom_call.1} parent=1 // pred_check
      _
    $region3: #{tpu_custom_call.1} parent=1 // pred_check_branch
      %18 = sbr.rel (0) target = $region5
    $region4: #{tpu_custom_call.1} parent=1 // pred_region
      %s20 = ssub.s32 128, 128
      %21 = vsyncadd [#allocation3], %s20
      %s23 = sshll.u32 [#allocation2], 4
      %s24 = int_to_ptr.vmem [resolvable:$true] %s23
      %26 = dma.hbm_to_vmem [thread:$0]  %s0, 128, %s24, [#allocation3]
    $region5: #{tpu_custom_call.1} parent=1 // pred_fallthru
      _
    // Predicated region
    $region6: #{tpu_custom_call.1} parent=1 // pred_check
      _
    $region7: #{tpu_custom_call.1} parent=1 // pred_check_branch
      %28 = sbr.rel (0) target = $region9
    $region8: #{tpu_custom_call.1} parent=1 // pred_region
      %s30 = ssub.s32 128, 128
      %31 = vsyncadd [#allocation6], %s30
      %s33 = sshll.u32 [#allocation5], 4
      %s34 = int_to_ptr.vmem [resolvable:$true] %s33
      %36 = dma.hbm_to_vmem [thread:$0]  %s1, 128, %s34, [#allocation6]
    $region9: #{tpu_custom_call.1} parent=1 // pred_fallthru
      _
    // Predicated region
    $region10: #{tpu_custom_call.1} parent=1 // pred_check
      _
    $region11: #{tpu_custom_call.1} parent=1 // pred_check_branch
      %38 = sbr.rel (0) target = $region13
    $region12: #{tpu_custom_call.1} parent=1 // pred_region
      %s40 = ssub.s32 128, 128
      %41 = vsyncadd [#allocation6], %s40
      %s43 = sshll.u32 [#allocation7], 4
      %s44 = int_to_ptr.vmem [resolvable:$true] %s43
      %46 = dma.hbm_to_vmem [thread:$0]  %s2, 128, %s44, [#allocation6]
    $region13: #{tpu_custom_call.1} parent=1 // pred_fallthru
      _
    // Predicated region
    $region14: #{tpu_custom_call.1} parent=1 // pred_check
      _
    $region15: #{tpu_custom_call.1} parent=1 // pred_check_branch
      %48 = sbr.rel (0) target = $region17
    $region16: #{tpu_custom_call.1} parent=1 // pred_region
      _
    $region17: #{tpu_custom_call.1} parent=1 // pred_fallthru
      _
    // Predicated region
    $region18: #{tpu_custom_call.1} parent=1 // pred_check
      _
    $region19: #{tpu_custom_call.1} parent=1 // pred_check_branch
      %50 = sbr.rel (0) target = $region21
    $region20: #{tpu_custom_call.1} parent=1 // pred_region
      _
    $region21: #{tpu_custom_call.1} parent=1 // pred_fallthru
      _
    // Predicated region
    $region22: #{tpu_custom_call.1} parent=1 // pred_check
      _
    $region23: #{tpu_custom_call.1} parent=1 // pred_check_branch
      %52 = sbr.rel (0) target = $region25
    $region24: #{tpu_custom_call.1} parent=1 // pred_region
      _
    $region25: #{tpu_custom_call.1} parent=1 // pred_fallthru
      _
    // Predicated region
    $region26: #{tpu_custom_call.1} parent=1 // pred_check
      _
    $region27: #{tpu_custom_call.1} parent=1 // pred_check_branch
      %54 = sbr.rel (0) target = $region29
    $region28: #{tpu_custom_call.1} parent=1 // pred_region
      %55 = dma.done [#allocation3], 128
    $region29: #{tpu_custom_call.1} parent=1 // pred_fallthru
      _
    // Predicated region
    $region30: #{tpu_custom_call.1} parent=1 // pred_check
      _
    $region31: #{tpu_custom_call.1} parent=1 // pred_check_branch
      %57 = sbr.rel (0) target = $region33
    $region32: #{tpu_custom_call.1} parent=1 // pred_region
      %58 = dma.done [#allocation6], 128
    $region33: #{tpu_custom_call.1} parent=1 // pred_fallthru
      _
    // Predicated region
    $region34: #{tpu_custom_call.1} parent=1 // pred_check
      _
    $region35: #{tpu_custom_call.1} parent=1 // pred_check_branch
      %60 = sbr.rel (0) target = $region37
    $region36: #{tpu_custom_call.1} parent=1 // pred_region
      %61 = dma.done [#allocation6], 128
    $region37: #{tpu_custom_call.1} parent=1 // pred_fallthru
      _
    %v62 = vld [vmem:[%s3] sm:$0x1]
    %v63 = vld [vmem:[%s3 + $0x1] sm:$0x1]
    %v64 = vld [vmem:[%s3 + $0x2] sm:$0x1]
    %v65 = vld [vmem:[#allocation2] sm:$0xff]
    %v66 = vld [vmem:[#allocation5] sm:$0xff]
    %68 = vset.pattern.permute.xlu0 0
    %69 = vperm.xlu0 %68, %v65
    %v70 = vpop.permute.xlu0 %69
    %v72 = vlaneseq
    %v73 = vshrl.u32 %v72, 7
    %v74 = vsub.s32 0, %v73
    %v75 = vrot.slane %v62, %v74
    %v76 = vmul.f32 %v70, %v75
    %78 = vset.pattern.permute.xlu0 0
    %79 = vperm.xlu0 %78, %v66
    %v80 = vpop.permute.xlu0 %79
    %v82 = vlaneseq
    %v83 = vshrl.u32 %v82, 7
    %v84 = vsub.s32 0, %v83
    %v85 = vrot.slane %v63, %v84
    %v86 = vmul.f32 %v80, %v85
    %v87 = vadd.f32 %v76, %v86
    %v88 = vlaneseq
    %v89 = vshrl.u32 %v88, 7
    %v90 = vsub.s32 0, %v89
    %v91 = vrot.slane %v64, %v90
    %v92 = vadd.f32 %v87, %v91
    %v93 = vand.u32 2147483647, %v92
    %vm94 = vcmp.le.f32.partialorder %v93, 0.7853982
    %vm95 = vcmp.lt.s32.totalorder %v92, 0
    %v96 = vand.u32 %v92, 2139095040
    %v97 = vshrl.u32 %v96, 23
    %v98 = vsub.s32 %v97, 127
    %v99 = vand.u32 2147483647, %v92
    %v100 = vand.u32 %v99, 8388607
    %v101 = vor.u32 %v100, 8388608
    %v102 = vsub.s32 0, %v101
    %v103 = vadd.s32 %v98, 1
    %vm104 = vcmp.gt.s32.totalorder %v103, 0
    %v105 = vsel %vm104, %v103, 0
    %v106 = vshrl.u32 %v105, 5
    %v107 = vand.u32 %v105, 31
    %v108 = vsub.s32 32, %v107
    %v109 = vshrl.u32 683565275, %v108
    %v110 = vshll.u32 683565275, %v107
    %v111 = vshrl.u32 2475754826, %v108
    %v112 = vor.u32 %v110, %v111
    %v113 = vshll.u32 2475754826, %v107
    %v114 = vshrl.u32 2131351028, %v108
    %v115 = vor.u32 %v113, %v114
    %v116 = vshll.u32 2131351028, %v107
    %v117 = vshrl.u32 2102212464, %v108
    %v118 = vor.u32 %v116, %v117
    %v119 = vshll.u32 2102212464, %v107
    %v120 = vshrl.u32 920167782, %v108
    %v121 = vor.u32 %v119, %v120
    %v122 = vshll.u32 920167782, %v107
    %v123 = vshrl.u32 1326507024, %v108
    %v124 = vor.u32 %v122, %v123
    %vm125 = vcmp.lt.s32.totalorder %v106, 1
    %vm126 = vcmp.lt.s32.totalorder %v106, 2
    %vm127 = vcmp.lt.s32.totalorder %v106, 3
    %vm128 = vcmp.lt.s32.totalorder %v106, 4
    %v129 = vsel %vm125, %v109, %v112
    %v130 = vsel %vm128, %v118, 2102212464
    %v131 = vsel %vm127, %v115, %v130
    %v132 = vsel %vm126, %v129, %v131
    %v133 = vsel %vm125, %v112, %v115
    %v134 = vsel %vm128, %v121, 920167782
    %v135 = vsel %vm127, %v118, %v134
    %v136 = vsel %vm126, %v133, %v135
    %v137 = vsel %vm125, %v115, %v118
    %v138 = vsel %vm128, %v124, 1326507024
    %v139 = vsel %vm127, %v121, %v138
    %v140 = vsel %vm126, %v137, %v139
    %v141 = vshll.u32 %v101, 8
    %v142 = vmul.u32.u64.compose %v141, %v140
    %v143 = vextract.low.u32 %v142
    %v144 = vextract.high.u32 %v142
    %v145 = vmul.u32.u64.compose %v141, %v136
    %v146 = vextract.low.u32 %v145
    %v147 = vextract.high.u32 %v145
    %v148 = vmul.u32 %v141, %v132
    %v149 = vadd.s32 %v144, %v146
    %vm150 = vc.u32 %v144, %v146
    %v151 = vadd.s32 %v147, 1
    %v152 = vsel %vm150, %v151, %v147
    %v153 = vadd.s32 %v148, %v152
    %v154 = vadd.s32 %v153, 536870912
    %v155 = vshrl.u32 %v154, 30
    %v156 = vshll.u32 %v155, 30
    %v157 = vsub.s32 %v153, %v156
    %vm158 = vcmp.lt.s32.totalorder %v157, 0
    %v159 = vsub.s32 0, %v157
    %v160 = vsel %vm158, %v159, %v157
    %v161 = vclz %v160
    %v162 = vsub.s32 %v161, 2
    %vm163 = vcmp.gt.s32.totalorder 0, %v162
    %v164 = vsel %vm163, 0, %v162
    %v165 = vsub.s32 32, %v164
    %v166 = vshll.u32 %v157, %v164
    %v167 = vshrl.u32 %v149, %v165
    %v168 = vor.u32 %v166, %v167
    %v169 = vsub.s32 4294967266, %v164
    %v170 = vadd.s32 %v169, 127
    %v171 = vshll.u32 %v170, 23
    %v172 = vor.u32 4788187, %v171
    %v173 = vand.u32 2147483647, %v172
    %v175 = vcvt.s32.f32 %v168
    %v176 = vmul.f32 %v175, %v173
    %v177 = vxor.u32 %v176, 2147483648
    %v178 = vsel %vm95, %v177, %v176
    %v179 = vsub.s32 4, %v155
    %v180 = vsel %vm95, %v179, %v155
    %v181 = vsel %vm94, %v92, %v178
    %v182 = vsel %vm94, 0, %v180
    %v183 = vcosq.f32.pop %v181
    %v184 = vsinq.f32.pop %v181
    %vm185 = vweird.f32 %v92
    %v186 = vadd.s32 %v182, 3
    %v187 = vand.u32 %v186, 3
    %vm188 = vcmp.lt.s32.totalorder %v187, 2
    %vm189 = vcmp.eq.s32.totalorder %v187, 0
    %v190 = vxor.u32 %v184, 2147483648
    %v191 = vsel %vm189, %v183, %v190
    %vm192 = vcmp.eq.s32.totalorder %v187, 2
    %v193 = vxor.u32 %v183, 2147483648
    %v194 = vsel %vm192, %v193, %v184
    %v195 = vsel %vm188, %v191, %v194
    %v196 = vsel %vm185, nan, %v195
    %v197 = vmul.f32 %v196, 0.11111111
    %v198 = vadd.f32 %v197, 0.0
    %v199 = vand.u32 2147483647, %v92
    %vm200 = vcmp.le.f32.partialorder %v199, 0.7853982
    %vm201 = vcmp.lt.s32.totalorder %v92, 0
    %v202 = vand.u32 %v92, 2139095040
    %v203 = vshrl.u32 %v202, 23
    %v204 = vsub.s32 %v203, 127
    %v205 = vand.u32 2147483647, %v92
    %v206 = vand.u32 %v205, 8388607
    %v207 = vor.u32 %v206, 8388608
    %v208 = vsub.s32 0, %v207
    %v209 = vadd.s32 %v204, 1
    %vm210 = vcmp.gt.s32.totalorder %v209, 0
    %v211 = vsel %vm210, %v209, 0
    %v212 = vshrl.u32 %v211, 5
    %v213 = vand.u32 %v211, 31
    %v214 = vsub.s32 32, %v213
    %v215 = vshrl.u32 683565275, %v214
    %v216 = vshll.u32 683565275, %v213
    %v217 = vshrl.u32 2475754826, %v214
    %v218 = vor.u32 %v216, %v217
    %v219 = vshll.u32 2475754826, %v213
    %v220 = vshrl.u32 2131351028, %v214
    %v221 = vor.u32 %v219, %v220
    %v222 = vshll.u32 2131351028, %v213
    %v223 = vshrl.u32 2102212464, %v214
    %v224 = vor.u32 %v222, %v223
    %v225 = vshll.u32 2102212464, %v213
    %v226 = vshrl.u32 920167782, %v214
    %v227 = vor.u32 %v225, %v226
    %v228 = vshll.u32 920167782, %v213
    %v229 = vshrl.u32 1326507024, %v214
    %v230 = vor.u32 %v228, %v229
    %vm231 = vcmp.lt.s32.totalorder %v212, 1
    %vm232 = vcmp.lt.s32.totalorder %v212, 2
    %vm233 = vcmp.lt.s32.totalorder %v212, 3
    %vm234 = vcmp.lt.s32.totalorder %v212, 4
    %v235 = vsel %vm231, %v215, %v218
    %v236 = vsel %vm234, %v224, 2102212464
    %v237 = vsel %vm233, %v221, %v236
    %v238 = vsel %vm232, %v235, %v237
    %v239 = vsel %vm231, %v218, %v221
    %v240 = vsel %vm234, %v227, 920167782
    %v241 = vsel %vm233, %v224, %v240
    %v242 = vsel %vm232, %v239, %v241
    %v243 = vsel %vm231, %v221, %v224
    %v244 = vsel %vm234, %v230, 1326507024
    %v245 = vsel %vm233, %v227, %v244
    %v246 = vsel %vm232, %v243, %v245
    %v247 = vshll.u32 %v207, 8
    %v248 = vmul.u32.u64.compose %v247, %v246
    %v249 = vextract.low.u32 %v248
    %v250 = vextract.high.u32 %v248
    %v251 = vmul.u32.u64.compose %v247, %v242
    %v252 = vextract.low.u32 %v251
    %v253 = vextract.high.u32 %v251
    %v254 = vmul.u32 %v247, %v238
    %v255 = vadd.s32 %v250, %v252
    %vm256 = vc.u32 %v250, %v252
    %v257 = vadd.s32 %v253, 1
    %v258 = vsel %vm256, %v257, %v253
    %v259 = vadd.s32 %v254, %v258
    %v260 = vadd.s32 %v259, 536870912
    %v261 = vshrl.u32 %v260, 30
    %v262 = vshll.u32 %v261, 30
    %v263 = vsub.s32 %v259, %v262
    %vm264 = vcmp.lt.s32.totalorder %v263, 0
    %v265 = vsub.s32 0, %v263
    %v266 = vsel %vm264, %v265, %v263
    %v267 = vclz %v266
    %v268 = vsub.s32 %v267, 2
    %vm269 = vcmp.gt.s32.totalorder 0, %v268
    %v270 = vsel %vm269, 0, %v268
    %v271 = vsub.s32 32, %v270
    %v272 = vshll.u32 %v263, %v270
    %v273 = vshrl.u32 %v255, %v271
    %v274 = vor.u32 %v272, %v273
    %v275 = vsub.s32 4294967266, %v270
    %v276 = vadd.s32 %v275, 127
    %v277 = vshll.u32 %v276, 23
    %v278 = vor.u32 4788187, %v277
    %v279 = vand.u32 2147483647, %v278
    %v281 = vcvt.s32.f32 %v274
    %v282 = vmul.f32 %v281, %v279
    %v283 = vxor.u32 %v282, 2147483648
    %v284 = vsel %vm201, %v283, %v282
    %v285 = vsub.s32 4, %v261
    %v286 = vsel %vm201, %v285, %v261
    %v287 = vsel %vm200, %v92, %v284
    %v288 = vsel %vm200, 0, %v286
    %v289 = vcosq.f32.pop %v287
    %v290 = vsinq.f32.pop %v287
    %vm291 = vweird.f32 %v92
    %v292 = vand.u32 %v288, 3
    %vm293 = vcmp.lt.s32.totalorder %v292, 2
    %vm294 = vcmp.eq.s32.totalorder %v292, 0
    %v295 = vxor.u32 %v290, 2147483648
    %v296 = vsel %vm294, %v289, %v295
    %vm297 = vcmp.eq.s32.totalorder %v292, 2
    %v298 = vxor.u32 %v289, 2147483648
    %v299 = vsel %vm297, %v298, %v290
    %v300 = vsel %vm293, %v296, %v299
    %v301 = vsel %vm291, nan, %v300
    %v302 = vmul.f32 %v301, 0.11111111
    %v303 = vadd.f32 %v302, 0.0
    %304 = vset.pattern.permute.xlu0 1
    %305 = vperm.xlu0 %304, %v65
    %v306 = vpop.permute.xlu0 %305
    %v308 = vmul.f32 %v306, %v75
    %309 = vset.pattern.permute.xlu0 1
    %310 = vperm.xlu0 %309, %v66
    %v311 = vpop.permute.xlu0 %310
    %v313 = vmul.f32 %v311, %v85
    %v314 = vadd.f32 %v308, %v313
    %v315 = vadd.f32 %v314, %v91
    %v316 = vand.u32 2147483647, %v315
    %vm317 = vcmp.le.f32.partialorder %v316, 0.7853982
    %vm318 = vcmp.lt.s32.totalorder %v315, 0
    %v319 = vand.u32 %v315, 2139095040
    %v320 = vshrl.u32 %v319, 23
    %v321 = vsub.s32 %v320, 127
    %v322 = vand.u32 2147483647, %v315
    %v323 = vand.u32 %v322, 8388607
    %v324 = vor.u32 %v323, 8388608
    %v325 = vsub.s32 0, %v324
    %v326 = vadd.s32 %v321, 1
    %vm327 = vcmp.gt.s32.totalorder %v326, 0
    %v328 = vsel %vm327, %v326, 0
    %v329 = vshrl.u32 %v328, 5
    %v330 = vand.u32 %v328, 31
    %v331 = vsub.s32 32, %v330
    %v332 = vshrl.u32 683565275, %v331
    %v333 = vshll.u32 683565275, %v330
    %v334 = vshrl.u32 2475754826, %v331
    %v335 = vor.u32 %v333, %v334
    %v336 = vshll.u32 2475754826, %v330
    %v337 = vshrl.u32 2131351028, %v331
    %v338 = vor.u32 %v336, %v337
    %v339 = vshll.u32 2131351028, %v330
    %v340 = vshrl.u32 2102212464, %v331
    %v341 = vor.u32 %v339, %v340
    %v342 = vshll.u32 2102212464, %v330
    %v343 = vshrl.u32 920167782, %v331
    %v344 = vor.u32 %v342, %v343
    %v345 = vshll.u32 920167782, %v330
    %v346 = vshrl.u32 1326507024, %v331
    %v347 = vor.u32 %v345, %v346
    %vm348 = vcmp.lt.s32.totalorder %v329, 1
    %vm349 = vcmp.lt.s32.totalorder %v329, 2
    %vm350 = vcmp.lt.s32.totalorder %v329, 3
    %vm351 = vcmp.lt.s32.totalorder %v329, 4
    %v352 = vsel %vm348, %v332, %v335
    %v353 = vsel %vm351, %v341, 2102212464
    %v354 = vsel %vm350, %v338, %v353
    %v355 = vsel %vm349, %v352, %v354
    %v356 = vsel %vm348, %v335, %v338
    %v357 = vsel %vm351, %v344, 920167782
    %v358 = vsel %vm350, %v341, %v357
    %v359 = vsel %vm349, %v356, %v358
    %v360 = vsel %vm348, %v338, %v341
    %v361 = vsel %vm351, %v347, 1326507024
    %v362 = vsel %vm350, %v344, %v361
    %v363 = vsel %vm349, %v360, %v362
    %v364 = vshll.u32 %v324, 8
    %v365 = vmul.u32.u64.compose %v364, %v363
    %v366 = vextract.low.u32 %v365
    %v367 = vextract.high.u32 %v365
    %v368 = vmul.u32.u64.compose %v364, %v359
    %v369 = vextract.low.u32 %v368
    %v370 = vextract.high.u32 %v368
    %v371 = vmul.u32 %v364, %v355
    %v372 = vadd.s32 %v367, %v369
    %vm373 = vc.u32 %v367, %v369
    %v374 = vadd.s32 %v370, 1
    %v375 = vsel %vm373, %v374, %v370
    %v376 = vadd.s32 %v371, %v375
    %v377 = vadd.s32 %v376, 536870912
    %v378 = vshrl.u32 %v377, 30
    %v379 = vshll.u32 %v378, 30
    %v380 = vsub.s32 %v376, %v379
    %vm381 = vcmp.lt.s32.totalorder %v380, 0
    %v382 = vsub.s32 0, %v380
    %v383 = vsel %vm381, %v382, %v380
    %v384 = vclz %v383
    %v385 = vsub.s32 %v384, 2
    %vm386 = vcmp.gt.s32.totalorder 0, %v385
    %v387 = vsel %vm386, 0, %v385
    %v388 = vsub.s32 32, %v387
    %v389 = vshll.u32 %v380, %v387
    %v390 = vshrl.u32 %v372, %v388
    %v391 = vor.u32 %v389, %v390
    %v392 = vsub.s32 4294967266, %v387
    %v393 = vadd.s32 %v392, 127
    %v394 = vshll.u32 %v393, 23
    %v395 = vor.u32 4788187, %v394
    %v396 = vand.u32 2147483647, %v395
    %v398 = vcvt.s32.f32 %v391
    %v399 = vmul.f32 %v398, %v396
    %v400 = vxor.u32 %v399, 2147483648
    %v401 = vsel %vm318, %v400, %v399
    %v402 = vsub.s32 4, %v378
    %v403 = vsel %vm318, %v402, %v378
    %v404 = vsel %vm317, %v315, %v401
    %v405 = vsel %vm317, 0, %v403
    %v406 = vcosq.f32.pop %v404
    %v407 = vsinq.f32.pop %v404
    %vm408 = vweird.f32 %v315
    %v409 = vadd.s32 %v405, 3
    %v410 = vand.u32 %v409, 3
    %vm411 = vcmp.lt.s32.totalorder %v410, 2
    %vm412 = vcmp.eq.s32.totalorder %v410, 0
    %v413 = vxor.u32 %v407, 2147483648
    %v414 = vsel %vm412, %v406, %v413
    %vm415 = vcmp.eq.s32.totalorder %v410, 2
    %v416 = vxor.u32 %v406, 2147483648
    %v417 = vsel %vm415, %v416, %v407
    %v418 = vsel %vm411, %v414, %v417
    %v419 = vsel %vm408, nan, %v418
    %v420 = vmul.f32 %v419, 0.11111111
    %v421 = vadd.f32 %v198, %v420
    %v422 = vand.u32 2147483647, %v315
    %vm423 = vcmp.le.f32.partialorder %v422, 0.7853982
    %vm424 = vcmp.lt.s32.totalorder %v315, 0
    %v425 = vand.u32 %v315, 2139095040
    %v426 = vshrl.u32 %v425, 23
    %v427 = vsub.s32 %v426, 127
    %v428 = vand.u32 2147483647, %v315
    %v429 = vand.u32 %v428, 8388607
    %v430 = vor.u32 %v429, 8388608
    %v431 = vsub.s32 0, %v430
    %v432 = vadd.s32 %v427, 1
    %vm433 = vcmp.gt.s32.totalorder %v432, 0
    %v434 = vsel %vm433, %v432, 0
    %v435 = vshrl.u32 %v434, 5
    %v436 = vand.u32 %v434, 31
    %v437 = vsub.s32 32, %v436
    %v438 = vshrl.u32 683565275, %v437
    %v439 = vshll.u32 683565275, %v436
    %v440 = vshrl.u32 2475754826, %v437
    %v441 = vor.u32 %v439, %v440
    %v442 = vshll.u32 2475754826, %v436
    %v443 = vshrl.u32 2131351028, %v437
    %v444 = vor.u32 %v442, %v443
    %v445 = vshll.u32 2131351028, %v436
    %v446 = vshrl.u32 2102212464, %v437
    %v447 = vor.u32 %v445, %v446
    %v448 = vshll.u32 2102212464, %v436
    %v449 = vshrl.u32 920167782, %v437
    %v450 = vor.u32 %v448, %v449
    %v451 = vshll.u32 920167782, %v436
    %v452 = vshrl.u32 1326507024, %v437
    %v453 = vor.u32 %v451, %v452
    %vm454 = vcmp.lt.s32.totalorder %v435, 1
    %vm455 = vcmp.lt.s32.totalorder %v435, 2
    %vm456 = vcmp.lt.s32.totalorder %v435, 3
    %vm457 = vcmp.lt.s32.totalorder %v435, 4
    %v458 = vsel %vm454, %v438, %v441
    %v459 = vsel %vm457, %v447, 2102212464
    %v460 = vsel %vm456, %v444, %v459
    %v461 = vsel %vm455, %v458, %v460
    %v462 = vsel %vm454, %v441, %v444
    %v463 = vsel %vm457, %v450, 920167782
    %v464 = vsel %vm456, %v447, %v463
    %v465 = vsel %vm455, %v462, %v464
    %v466 = vsel %vm454, %v444, %v447
    %v467 = vsel %vm457, %v453, 1326507024
    %v468 = vsel %vm456, %v450, %v467
    %v469 = vsel %vm455, %v466, %v468
    %v470 = vshll.u32 %v430, 8
    %v471 = vmul.u32.u64.compose %v470, %v469
    %v472 = vextract.low.u32 %v471
    %v473 = vextract.high.u32 %v471
    %v474 = vmul.u32.u64.compose %v470, %v465
    %v475 = vextract.low.u32 %v474
    %v476 = vextract.high.u32 %v474
    %v477 = vmul.u32 %v470, %v461
    %v478 = vadd.s32 %v473, %v475
    %vm479 = vc.u32 %v473, %v475
    %v480 = vadd.s32 %v476, 1
    %v481 = vsel %vm479, %v480, %v476
    %v482 = vadd.s32 %v477, %v481
    %v483 = vadd.s32 %v482, 536870912
    %v484 = vshrl.u32 %v483, 30
    %v485 = vshll.u32 %v484, 30
    %v486 = vsub.s32 %v482, %v485
    %vm487 = vcmp.lt.s32.totalorder %v486, 0
    %v488 = vsub.s32 0, %v486
    %v489 = vsel %vm487, %v488, %v486
    %v490 = vclz %v489
    %v491 = vsub.s32 %v490, 2
    %vm492 = vcmp.gt.s32.totalorder 0, %v491
    %v493 = vsel %vm492, 0, %v491
    %v494 = vsub.s32 32, %v493
    %v495 = vshll.u32 %v486, %v493
    %v496 = vshrl.u32 %v478, %v494
    %v497 = vor.u32 %v495, %v496
    %v498 = vsub.s32 4294967266, %v493
    %v499 = vadd.s32 %v498, 127
    %v500 = vshll.u32 %v499, 23
    %v501 = vor.u32 4788187, %v500
    %v502 = vand.u32 2147483647, %v501
    %v504 = vcvt.s32.f32 %v497
    %v505 = vmul.f32 %v504, %v502
    %v506 = vxor.u32 %v505, 2147483648
    %v507 = vsel %vm424, %v506, %v505
    %v508 = vsub.s32 4, %v484
    %v509 = vsel %vm424, %v508, %v484
    %v510 = vsel %vm423, %v315, %v507
    %v511 = vsel %vm423, 0, %v509
    %v512 = vcosq.f32.pop %v510
    %v513 = vsinq.f32.pop %v510
    %vm514 = vweird.f32 %v315
    %v515 = vand.u32 %v511, 3
    %vm516 = vcmp.lt.s32.totalorder %v515, 2
    %vm517 = vcmp.eq.s32.totalorder %v515, 0
    %v518 = vxor.u32 %v513, 2147483648
    %v519 = vsel %vm517, %v512, %v518
    %vm520 = vcmp.eq.s32.totalorder %v515, 2
    %v521 = vxor.u32 %v512, 2147483648
    %v522 = vsel %vm520, %v521, %v513
    %v523 = vsel %vm516, %v519, %v522
    %v524 = vsel %vm514, nan, %v523
    %v525 = vmul.f32 %v524, 0.11111111
    %v526 = vadd.f32 %v303, %v525
    %527 = vset.pattern.permute.xlu0 2
    %528 = vperm.xlu0 %527, %v65
    %v529 = vpop.permute.xlu0 %528
    %v531 = vmul.f32 %v529, %v75
    %532 = vset.pattern.permute.xlu0 2
    %533 = vperm.xlu0 %532, %v66
    %v534 = vpop.permute.xlu0 %533
    %v536 = vmul.f32 %v534, %v85
    %v537 = vadd.f32 %v531, %v536
    %v538 = vadd.f32 %v537, %v91
    %v539 = vand.u32 2147483647, %v538
    %vm540 = vcmp.le.f32.partialorder %v539, 0.7853982
    %vm541 = vcmp.lt.s32.totalorder %v538, 0
    %v542 = vand.u32 %v538, 2139095040
    %v543 = vshrl.u32 %v542, 23
    %v544 = vsub.s32 %v543, 127
    %v545 = vand.u32 2147483647, %v538
    %v546 = vand.u32 %v545, 8388607
    %v547 = vor.u32 %v546, 8388608
    %v548 = vsub.s32 0, %v547
    %v549 = vadd.s32 %v544, 1
    %vm550 = vcmp.gt.s32.totalorder %v549, 0
    %v551 = vsel %vm550, %v549, 0
    %v552 = vshrl.u32 %v551, 5
    %v553 = vand.u32 %v551, 31
    %v554 = vsub.s32 32, %v553
    %v555 = vshrl.u32 683565275, %v554
    %v556 = vshll.u32 683565275, %v553
    %v557 = vshrl.u32 2475754826, %v554
    %v558 = vor.u32 %v556, %v557
    %v559 = vshll.u32 2475754826, %v553
    %v560 = vshrl.u32 2131351028, %v554
    %v561 = vor.u32 %v559, %v560
    %v562 = vshll.u32 2131351028, %v553
    %v563 = vshrl.u32 2102212464, %v554
    %v564 = vor.u32 %v562, %v563
    %v565 = vshll.u32 2102212464, %v553
    %v566 = vshrl.u32 920167782, %v554
    %v567 = vor.u32 %v565, %v566
    %v568 = vshll.u32 920167782, %v553
    %v569 = vshrl.u32 1326507024, %v554
    %v570 = vor.u32 %v568, %v569
    %vm571 = vcmp.lt.s32.totalorder %v552, 1
    %vm572 = vcmp.lt.s32.totalorder %v552, 2
    %vm573 = vcmp.lt.s32.totalorder %v552, 3
    %vm574 = vcmp.lt.s32.totalorder %v552, 4
    %v575 = vsel %vm571, %v555, %v558
    %v576 = vsel %vm574, %v564, 2102212464
    %v577 = vsel %vm573, %v561, %v576
    %v578 = vsel %vm572, %v575, %v577
    %v579 = vsel %vm571, %v558, %v561
    %v580 = vsel %vm574, %v567, 920167782
    %v581 = vsel %vm573, %v564, %v580
    %v582 = vsel %vm572, %v579, %v581
    %v583 = vsel %vm571, %v561, %v564
    %v584 = vsel %vm574, %v570, 1326507024
    %v585 = vsel %vm573, %v567, %v584
    %v586 = vsel %vm572, %v583, %v585
    %v587 = vshll.u32 %v547, 8
    %v588 = vmul.u32.u64.compose %v587, %v586
    %v589 = vextract.low.u32 %v588
    %v590 = vextract.high.u32 %v588
    %v591 = vmul.u32.u64.compose %v587, %v582
    %v592 = vextract.low.u32 %v591
    %v593 = vextract.high.u32 %v591
    %v594 = vmul.u32 %v587, %v578
    %v595 = vadd.s32 %v590, %v592
    %vm596 = vc.u32 %v590, %v592
    %v597 = vadd.s32 %v593, 1
    %v598 = vsel %vm596, %v597, %v593
    %v599 = vadd.s32 %v594, %v598
    %v600 = vadd.s32 %v599, 536870912
    %v601 = vshrl.u32 %v600, 30
    %v602 = vshll.u32 %v601, 30
    %v603 = vsub.s32 %v599, %v602
    %vm604 = vcmp.lt.s32.totalorder %v603, 0
    %v605 = vsub.s32 0, %v603
    %v606 = vsel %vm604, %v605, %v603
    %v607 = vclz %v606
    %v608 = vsub.s32 %v607, 2
    %vm609 = vcmp.gt.s32.totalorder 0, %v608
    %v610 = vsel %vm609, 0, %v608
    %v611 = vsub.s32 32, %v610
    %v612 = vshll.u32 %v603, %v610
    %v613 = vshrl.u32 %v595, %v611
    %v614 = vor.u32 %v612, %v613
    %v615 = vsub.s32 4294967266, %v610
    %v616 = vadd.s32 %v615, 127
    %v617 = vshll.u32 %v616, 23
    %v618 = vor.u32 4788187, %v617
    %v619 = vand.u32 2147483647, %v618
    %v621 = vcvt.s32.f32 %v614
    %v622 = vmul.f32 %v621, %v619
    %v623 = vxor.u32 %v622, 2147483648
    %v624 = vsel %vm541, %v623, %v622
    %v625 = vsub.s32 4, %v601
    %v626 = vsel %vm541, %v625, %v601
    %v627 = vsel %vm540, %v538, %v624
    %v628 = vsel %vm540, 0, %v626
    %v629 = vcosq.f32.pop %v627
    %v630 = vsinq.f32.pop %v627
    %vm631 = vweird.f32 %v538
    %v632 = vadd.s32 %v628, 3
    %v633 = vand.u32 %v632, 3
    %vm634 = vcmp.lt.s32.totalorder %v633, 2
    %vm635 = vcmp.eq.s32.totalorder %v633, 0
    %v636 = vxor.u32 %v630, 2147483648
    %v637 = vsel %vm635, %v629, %v636
    %vm638 = vcmp.eq.s32.totalorder %v633, 2
    %v639 = vxor.u32 %v629, 2147483648
    %v640 = vsel %vm638, %v639, %v630
    %v641 = vsel %vm634, %v637, %v640
    %v642 = vsel %vm631, nan, %v641
    %v643 = vmul.f32 %v642, 0.11111111
    %v644 = vadd.f32 %v421, %v643
    %v645 = vand.u32 2147483647, %v538
    %vm646 = vcmp.le.f32.partialorder %v645, 0.7853982
    %vm647 = vcmp.lt.s32.totalorder %v538, 0
    %v648 = vand.u32 %v538, 2139095040
    %v649 = vshrl.u32 %v648, 23
    %v650 = vsub.s32 %v649, 127
    %v651 = vand.u32 2147483647, %v538
    %v652 = vand.u32 %v651, 8388607
    %v653 = vor.u32 %v652, 8388608
    %v654 = vsub.s32 0, %v653
    %v655 = vadd.s32 %v650, 1
    %vm656 = vcmp.gt.s32.totalorder %v655, 0
    %v657 = vsel %vm656, %v655, 0
    %v658 = vshrl.u32 %v657, 5
    %v659 = vand.u32 %v657, 31
    %v660 = vsub.s32 32, %v659
    %v661 = vshrl.u32 683565275, %v660
    %v662 = vshll.u32 683565275, %v659
    %v663 = vshrl.u32 2475754826, %v660
    %v664 = vor.u32 %v662, %v663
    %v665 = vshll.u32 2475754826, %v659
    %v666 = vshrl.u32 2131351028, %v660
    %v667 = vor.u32 %v665, %v666
    %v668 = vshll.u32 2131351028, %v659
    %v669 = vshrl.u32 2102212464, %v660
    %v670 = vor.u32 %v668, %v669
    %v671 = vshll.u32 2102212464, %v659
    %v672 = vshrl.u32 920167782, %v660
    %v673 = vor.u32 %v671, %v672
    %v674 = vshll.u32 920167782, %v659
    %v675 = vshrl.u32 1326507024, %v660
    %v676 = vor.u32 %v674, %v675
    %vm677 = vcmp.lt.s32.totalorder %v658, 1
    %vm678 = vcmp.lt.s32.totalorder %v658, 2
    %vm679 = vcmp.lt.s32.totalorder %v658, 3
    %vm680 = vcmp.lt.s32.totalorder %v658, 4
    %v681 = vsel %vm677, %v661, %v664
    %v682 = vsel %vm680, %v670, 2102212464
    %v683 = vsel %vm679, %v667, %v682
    %v684 = vsel %vm678, %v681, %v683
    %v685 = vsel %vm677, %v664, %v667
    %v686 = vsel %vm680, %v673, 920167782
    %v687 = vsel %vm679, %v670, %v686
    %v688 = vsel %vm678, %v685, %v687
    %v689 = vsel %vm677, %v667, %v670
    %v690 = vsel %vm680, %v676, 1326507024
    %v691 = vsel %vm679, %v673, %v690
    %v692 = vsel %vm678, %v689, %v691
    %v693 = vshll.u32 %v653, 8
    %v694 = vmul.u32.u64.compose %v693, %v692
    %v695 = vextract.low.u32 %v694
    %v696 = vextract.high.u32 %v694
    %v697 = vmul.u32.u64.compose %v693, %v688
    %v698 = vextract.low.u32 %v697
    %v699 = vextract.high.u32 %v697
    %v700 = vmul.u32 %v693, %v684
    %v701 = vadd.s32 %v696, %v698
    %vm702 = vc.u32 %v696, %v698
    %v703 = vadd.s32 %v699, 1
    %v704 = vsel %vm702, %v703, %v699
    %v705 = vadd.s32 %v700, %v704
    %v706 = vadd.s32 %v705, 536870912
    %v707 = vshrl.u32 %v706, 30
    %v708 = vshll.u32 %v707, 30
    %v709 = vsub.s32 %v705, %v708
    %vm710 = vcmp.lt.s32.totalorder %v709, 0
    %v711 = vsub.s32 0, %v709
    %v712 = vsel %vm710, %v711, %v709
    %v713 = vclz %v712
    %v714 = vsub.s32 %v713, 2
    %vm715 = vcmp.gt.s32.totalorder 0, %v714
    %v716 = vsel %vm715, 0, %v714
    %v717 = vsub.s32 32, %v716
    %v718 = vshll.u32 %v709, %v716
    %v719 = vshrl.u32 %v701, %v717
    %v720 = vor.u32 %v718, %v719
    %v721 = vsub.s32 4294967266, %v716
    %v722 = vadd.s32 %v721, 127
    %v723 = vshll.u32 %v722, 23
    %v724 = vor.u32 4788187, %v723
    %v725 = vand.u32 2147483647, %v724
    %v727 = vcvt.s32.f32 %v720
    %v728 = vmul.f32 %v727, %v725
    %v729 = vxor.u32 %v728, 2147483648
    %v730 = vsel %vm647, %v729, %v728
    %v731 = vsub.s32 4, %v707
    %v732 = vsel %vm647, %v731, %v707
    %v733 = vsel %vm646, %v538, %v730
    %v734 = vsel %vm646, 0, %v732
    %v735 = vcosq.f32.pop %v733
    %v736 = vsinq.f32.pop %v733
    %vm737 = vweird.f32 %v538
    %v738 = vand.u32 %v734, 3
    %vm739 = vcmp.lt.s32.totalorder %v738, 2
    %vm740 = vcmp.eq.s32.totalorder %v738, 0
    %v741 = vxor.u32 %v736, 2147483648
    %v742 = vsel %vm740, %v735, %v741
    %vm743 = vcmp.eq.s32.totalorder %v738, 2
    %v744 = vxor.u32 %v735, 2147483648
    %v745 = vsel %vm743, %v744, %v736
    %v746 = vsel %vm739, %v742, %v745
    %v747 = vsel %vm737, nan, %v746
    %v748 = vmul.f32 %v747, 0.11111111
    %v749 = vadd.f32 %v526, %v748
    %750 = vset.pattern.permute.xlu0 3
    %751 = vperm.xlu0 %750, %v65
    %v752 = vpop.permute.xlu0 %751
    %v754 = vmul.f32 %v752, %v75
    %755 = vset.pattern.permute.xlu0 3
    %756 = vperm.xlu0 %755, %v66
    %v757 = vpop.permute.xlu0 %756
    %v759 = vmul.f32 %v757, %v85
    %v760 = vadd.f32 %v754, %v759
    %v761 = vadd.f32 %v760, %v91
    %v762 = vand.u32 2147483647, %v761
    %vm763 = vcmp.le.f32.partialorder %v762, 0.7853982
    %vm764 = vcmp.lt.s32.totalorder %v761, 0
    %v765 = vand.u32 %v761, 2139095040
    %v766 = vshrl.u32 %v765, 23
    %v767 = vsub.s32 %v766, 127
    %v768 = vand.u32 2147483647, %v761
    %v769 = vand.u32 %v768, 8388607
    %v770 = vor.u32 %v769, 8388608
    %v771 = vsub.s32 0, %v770
    %v772 = vadd.s32 %v767, 1
    %vm773 = vcmp.gt.s32.totalorder %v772, 0
    %v774 = vsel %vm773, %v772, 0
    %v775 = vshrl.u32 %v774, 5
    %v776 = vand.u32 %v774, 31
    %v777 = vsub.s32 32, %v776
    %v778 = vshrl.u32 683565275, %v777
    %v779 = vshll.u32 683565275, %v776
    %v780 = vshrl.u32 2475754826, %v777
    %v781 = vor.u32 %v779, %v780
    %v782 = vshll.u32 2475754826, %v776
    %v783 = vshrl.u32 2131351028, %v777
    %v784 = vor.u32 %v782, %v783
    %v785 = vshll.u32 2131351028, %v776
    %v786 = vshrl.u32 2102212464, %v777
    %v787 = vor.u32 %v785, %v786
    %v788 = vshll.u32 2102212464, %v776
    %v789 = vshrl.u32 920167782, %v777
    %v790 = vor.u32 %v788, %v789
    %v791 = vshll.u32 920167782, %v776
    %v792 = vshrl.u32 1326507024, %v777
    %v793 = vor.u32 %v791, %v792
    %vm794 = vcmp.lt.s32.totalorder %v775, 1
    %vm795 = vcmp.lt.s32.totalorder %v775, 2
    %vm796 = vcmp.lt.s32.totalorder %v775, 3
    %vm797 = vcmp.lt.s32.totalorder %v775, 4
    %v798 = vsel %vm794, %v778, %v781
    %v799 = vsel %vm797, %v787, 2102212464
    %v800 = vsel %vm796, %v784, %v799
    %v801 = vsel %vm795, %v798, %v800
    %v802 = vsel %vm794, %v781, %v784
    %v803 = vsel %vm797, %v790, 920167782
    %v804 = vsel %vm796, %v787, %v803
    %v805 = vsel %vm795, %v802, %v804
    %v806 = vsel %vm794, %v784, %v787
    %v807 = vsel %vm797, %v793, 1326507024
    %v808 = vsel %vm796, %v790, %v807
    %v809 = vsel %vm795, %v806, %v808
    %v810 = vshll.u32 %v770, 8
    %v811 = vmul.u32.u64.compose %v810, %v809
    %v812 = vextract.low.u32 %v811
    %v813 = vextract.high.u32 %v811
    %v814 = vmul.u32.u64.compose %v810, %v805
    %v815 = vextract.low.u32 %v814
    %v816 = vextract.high.u32 %v814
    %v817 = vmul.u32 %v810, %v801
    %v818 = vadd.s32 %v813, %v815
    %vm819 = vc.u32 %v813, %v815
    %v820 = vadd.s32 %v816, 1
    %v821 = vsel %vm819, %v820, %v816
    %v822 = vadd.s32 %v817, %v821
    %v823 = vadd.s32 %v822, 536870912
    %v824 = vshrl.u32 %v823, 30
    %v825 = vshll.u32 %v824, 30
    %v826 = vsub.s32 %v822, %v825
    %vm827 = vcmp.lt.s32.totalorder %v826, 0
    %v828 = vsub.s32 0, %v826
    %v829 = vsel %vm827, %v828, %v826
    %v830 = vclz %v829
    %v831 = vsub.s32 %v830, 2
    %vm832 = vcmp.gt.s32.totalorder 0, %v831
    %v833 = vsel %vm832, 0, %v831
    %v834 = vsub.s32 32, %v833
    %v835 = vshll.u32 %v826, %v833
    %v836 = vshrl.u32 %v818, %v834
    %v837 = vor.u32 %v835, %v836
    %v838 = vsub.s32 4294967266, %v833
    %v839 = vadd.s32 %v838, 127
    %v840 = vshll.u32 %v839, 23
    %v841 = vor.u32 4788187, %v840
    %v842 = vand.u32 2147483647, %v841
    %v844 = vcvt.s32.f32 %v837
    %v845 = vmul.f32 %v844, %v842
    %v846 = vxor.u32 %v845, 2147483648
    %v847 = vsel %vm764, %v846, %v845
    %v848 = vsub.s32 4, %v824
    %v849 = vsel %vm764, %v848, %v824
    %v850 = vsel %vm763, %v761, %v847
    %v851 = vsel %vm763, 0, %v849
    %v852 = vcosq.f32.pop %v850
    %v853 = vsinq.f32.pop %v850
    %vm854 = vweird.f32 %v761
    %v855 = vadd.s32 %v851, 3
    %v856 = vand.u32 %v855, 3
    %vm857 = vcmp.lt.s32.totalorder %v856, 2
    %vm858 = vcmp.eq.s32.totalorder %v856, 0
    %v859 = vxor.u32 %v853, 2147483648
    %v860 = vsel %vm858, %v852, %v859
    %vm861 = vcmp.eq.s32.totalorder %v856, 2
    %v862 = vxor.u32 %v852, 2147483648
    %v863 = vsel %vm861, %v862, %v853
    %v864 = vsel %vm857, %v860, %v863
    %v865 = vsel %vm854, nan, %v864
    %v866 = vmul.f32 %v865, 0.11111111
    %v867 = vadd.f32 %v644, %v866
    %v868 = vand.u32 2147483647, %v761
    %vm869 = vcmp.le.f32.partialorder %v868, 0.7853982
    %vm870 = vcmp.lt.s32.totalorder %v761, 0
    %v871 = vand.u32 %v761, 2139095040
    %v872 = vshrl.u32 %v871, 23
    %v873 = vsub.s32 %v872, 127
    %v874 = vand.u32 2147483647, %v761
    %v875 = vand.u32 %v874, 8388607
    %v876 = vor.u32 %v875, 8388608
    %v877 = vsub.s32 0, %v876
    %v878 = vadd.s32 %v873, 1
    %vm879 = vcmp.gt.s32.totalorder %v878, 0
    %v880 = vsel %vm879, %v878, 0
    %v881 = vshrl.u32 %v880, 5
    %v882 = vand.u32 %v880, 31
    %v883 = vsub.s32 32, %v882
    %v884 = vshrl.u32 683565275, %v883
    %v885 = vshll.u32 683565275, %v882
    %v886 = vshrl.u32 2475754826, %v883
    %v887 = vor.u32 %v885, %v886
    %v888 = vshll.u32 2475754826, %v882
    %v889 = vshrl.u32 2131351028, %v883
    %v890 = vor.u32 %v888, %v889
    %v891 = vshll.u32 2131351028, %v882
    %v892 = vshrl.u32 2102212464, %v883
    %v893 = vor.u32 %v891, %v892
    %v894 = vshll.u32 2102212464, %v882
    %v895 = vshrl.u32 920167782, %v883
    %v896 = vor.u32 %v894, %v895
    %v897 = vshll.u32 920167782, %v882
    %v898 = vshrl.u32 1326507024, %v883
    %v899 = vor.u32 %v897, %v898
    %vm900 = vcmp.lt.s32.totalorder %v881, 1
    %vm901 = vcmp.lt.s32.totalorder %v881, 2
    %vm902 = vcmp.lt.s32.totalorder %v881, 3
    %vm903 = vcmp.lt.s32.totalorder %v881, 4
    %v904 = vsel %vm900, %v884, %v887
    %v905 = vsel %vm903, %v893, 2102212464
    %v906 = vsel %vm902, %v890, %v905
    %v907 = vsel %vm901, %v904, %v906
    %v908 = vsel %vm900, %v887, %v890
    %v909 = vsel %vm903, %v896, 920167782
    %v910 = vsel %vm902, %v893, %v909
    %v911 = vsel %vm901, %v908, %v910
    %v912 = vsel %vm900, %v890, %v893
    %v913 = vsel %vm903, %v899, 1326507024
    %v914 = vsel %vm902, %v896, %v913
    %v915 = vsel %vm901, %v912, %v914
    %v916 = vshll.u32 %v876, 8
    %v917 = vmul.u32.u64.compose %v916, %v915
    %v918 = vextract.low.u32 %v917
    %v919 = vextract.high.u32 %v917
    %v920 = vmul.u32.u64.compose %v916, %v911
    %v921 = vextract.low.u32 %v920
    %v922 = vextract.high.u32 %v920
    %v923 = vmul.u32 %v916, %v907
    %v924 = vadd.s32 %v919, %v921
    %vm925 = vc.u32 %v919, %v921
    %v926 = vadd.s32 %v922, 1
    %v927 = vsel %vm925, %v926, %v922
    %v928 = vadd.s32 %v923, %v927
    %v929 = vadd.s32 %v928, 536870912
    %v930 = vshrl.u32 %v929, 30
    %v931 = vshll.u32 %v930, 30
    %v932 = vsub.s32 %v928, %v931
    %vm933 = vcmp.lt.s32.totalorder %v932, 0
    %v934 = vsub.s32 0, %v932
    %v935 = vsel %vm933, %v934, %v932
    %v936 = vclz %v935
    %v937 = vsub.s32 %v936, 2
    %vm938 = vcmp.gt.s32.totalorder 0, %v937
    %v939 = vsel %vm938, 0, %v937
    %v940 = vsub.s32 32, %v939
    %v941 = vshll.u32 %v932, %v939
    %v942 = vshrl.u32 %v924, %v940
    %v943 = vor.u32 %v941, %v942
    %v944 = vsub.s32 4294967266, %v939
    %v945 = vadd.s32 %v944, 127
    %v946 = vshll.u32 %v945, 23
    %v947 = vor.u32 4788187, %v946
    %v948 = vand.u32 2147483647, %v947
    %v950 = vcvt.s32.f32 %v943
    %v951 = vmul.f32 %v950, %v948
    %v952 = vxor.u32 %v951, 2147483648
    %v953 = vsel %vm870, %v952, %v951
    %v954 = vsub.s32 4, %v930
    %v955 = vsel %vm870, %v954, %v930
    %v956 = vsel %vm869, %v761, %v953
    %v957 = vsel %vm869, 0, %v955
    %v958 = vcosq.f32.pop %v956
    %v959 = vsinq.f32.pop %v956
    %vm960 = vweird.f32 %v761
    %v961 = vand.u32 %v957, 3
    %vm962 = vcmp.lt.s32.totalorder %v961, 2
    %vm963 = vcmp.eq.s32.totalorder %v961, 0
    %v964 = vxor.u32 %v959, 2147483648
    %v965 = vsel %vm963, %v958, %v964
    %vm966 = vcmp.eq.s32.totalorder %v961, 2
    %v967 = vxor.u32 %v958, 2147483648
    %v968 = vsel %vm966, %v967, %v959
    %v969 = vsel %vm962, %v965, %v968
    %v970 = vsel %vm960, nan, %v969
    %v971 = vmul.f32 %v970, 0.11111111
    %v972 = vadd.f32 %v749, %v971
    %973 = vset.pattern.permute.xlu0 4
    %974 = vperm.xlu0 %973, %v65
    %v975 = vpop.permute.xlu0 %974
    %v977 = vmul.f32 %v975, %v75
    %978 = vset.pattern.permute.xlu0 4
    %979 = vperm.xlu0 %978, %v66
    %v980 = vpop.permute.xlu0 %979
    %v982 = vmul.f32 %v980, %v85
    %v983 = vadd.f32 %v977, %v982
    %v984 = vadd.f32 %v983, %v91
    %v985 = vand.u32 2147483647, %v984
    %vm986 = vcmp.le.f32.partialorder %v985, 0.7853982
    %vm987 = vcmp.lt.s32.totalorder %v984, 0
    %v988 = vand.u32 %v984, 2139095040
    %v989 = vshrl.u32 %v988, 23
    %v990 = vsub.s32 %v989, 127
    %v991 = vand.u32 2147483647, %v984
    %v992 = vand.u32 %v991, 8388607
    %v993 = vor.u32 %v992, 8388608
    %v994 = vsub.s32 0, %v993
    %v995 = vadd.s32 %v990, 1
    %vm996 = vcmp.gt.s32.totalorder %v995, 0
    %v997 = vsel %vm996, %v995, 0
    %v998 = vshrl.u32 %v997, 5
    %v999 = vand.u32 %v997, 31
    %v1000 = vsub.s32 32, %v999
    %v1001 = vshrl.u32 683565275, %v1000
    %v1002 = vshll.u32 683565275, %v999
    %v1003 = vshrl.u32 2475754826, %v1000
    %v1004 = vor.u32 %v1002, %v1003
    %v1005 = vshll.u32 2475754826, %v999
    %v1006 = vshrl.u32 2131351028, %v1000
    %v1007 = vor.u32 %v1005, %v1006
    %v1008 = vshll.u32 2131351028, %v999
    %v1009 = vshrl.u32 2102212464, %v1000
    %v1010 = vor.u32 %v1008, %v1009
    %v1011 = vshll.u32 2102212464, %v999
    %v1012 = vshrl.u32 920167782, %v1000
    %v1013 = vor.u32 %v1011, %v1012
    %v1014 = vshll.u32 920167782, %v999
    %v1015 = vshrl.u32 1326507024, %v1000
    %v1016 = vor.u32 %v1014, %v1015
    %vm1017 = vcmp.lt.s32.totalorder %v998, 1
    %vm1018 = vcmp.lt.s32.totalorder %v998, 2
    %vm1019 = vcmp.lt.s32.totalorder %v998, 3
    %vm1020 = vcmp.lt.s32.totalorder %v998, 4
    %v1021 = vsel %vm1017, %v1001, %v1004
    %v1022 = vsel %vm1020, %v1010, 2102212464
    %v1023 = vsel %vm1019, %v1007, %v1022
    %v1024 = vsel %vm1018, %v1021, %v1023
    %v1025 = vsel %vm1017, %v1004, %v1007
    %v1026 = vsel %vm1020, %v1013, 920167782
    %v1027 = vsel %vm1019, %v1010, %v1026
    %v1028 = vsel %vm1018, %v1025, %v1027
    %v1029 = vsel %vm1017, %v1007, %v1010
    %v1030 = vsel %vm1020, %v1016, 1326507024
    %v1031 = vsel %vm1019, %v1013, %v1030
    %v1032 = vsel %vm1018, %v1029, %v1031
    %v1033 = vshll.u32 %v993, 8
    %v1034 = vmul.u32.u64.compose %v1033, %v1032
    %v1035 = vextract.low.u32 %v1034
    %v1036 = vextract.high.u32 %v1034
    %v1037 = vmul.u32.u64.compose %v1033, %v1028
    %v1038 = vextract.low.u32 %v1037
    %v1039 = vextract.high.u32 %v1037
    %v1040 = vmul.u32 %v1033, %v1024
    %v1041 = vadd.s32 %v1036, %v1038
    %vm1042 = vc.u32 %v1036, %v1038
    %v1043 = vadd.s32 %v1039, 1
    %v1044 = vsel %vm1042, %v1043, %v1039
    %v1045 = vadd.s32 %v1040, %v1044
    %v1046 = vadd.s32 %v1045, 536870912
    %v1047 = vshrl.u32 %v1046, 30
    %v1048 = vshll.u32 %v1047, 30
    %v1049 = vsub.s32 %v1045, %v1048
    %vm1050 = vcmp.lt.s32.totalorder %v1049, 0
    %v1051 = vsub.s32 0, %v1049
    %v1052 = vsel %vm1050, %v1051, %v1049
    %v1053 = vclz %v1052
    %v1054 = vsub.s32 %v1053, 2
    %vm1055 = vcmp.gt.s32.totalorder 0, %v1054
    %v1056 = vsel %vm1055, 0, %v1054
    %v1057 = vsub.s32 32, %v1056
    %v1058 = vshll.u32 %v1049, %v1056
    %v1059 = vshrl.u32 %v1041, %v1057
    %v1060 = vor.u32 %v1058, %v1059
    %v1061 = vsub.s32 4294967266, %v1056
    %v1062 = vadd.s32 %v1061, 127
    %v1063 = vshll.u32 %v1062, 23
    %v1064 = vor.u32 4788187, %v1063
    %v1065 = vand.u32 2147483647, %v1064
    %v1067 = vcvt.s32.f32 %v1060
    %v1068 = vmul.f32 %v1067, %v1065
    %v1069 = vxor.u32 %v1068, 2147483648
    %v1070 = vsel %vm987, %v1069, %v1068
    %v1071 = vsub.s32 4, %v1047
    %v1072 = vsel %vm987, %v1071, %v1047
    %v1073 = vsel %vm986, %v984, %v1070
    %v1074 = vsel %vm986, 0, %v1072
    %v1075 = vcosq.f32.pop %v1073
    %v1076 = vsinq.f32.pop %v1073
    %vm1077 = vweird.f32 %v984
    %v1078 = vadd.s32 %v1074, 3
    %v1079 = vand.u32 %v1078, 3
    %vm1080 = vcmp.lt.s32.totalorder %v1079, 2
    %vm1081 = vcmp.eq.s32.totalorder %v1079, 0
    %v1082 = vxor.u32 %v1076, 2147483648
    %v1083 = vsel %vm1081, %v1075, %v1082
    %vm1084 = vcmp.eq.s32.totalorder %v1079, 2
    %v1085 = vxor.u32 %v1075, 2147483648
    %v1086 = vsel %vm1084, %v1085, %v1076
    %v1087 = vsel %vm1080, %v1083, %v1086
    %v1088 = vsel %vm1077, nan, %v1087
    %v1089 = vmul.f32 %v1088, 0.11111111
    %v1090 = vadd.f32 %v867, %v1089
    %v1091 = vand.u32 2147483647, %v984
    %vm1092 = vcmp.le.f32.partialorder %v1091, 0.7853982
    %vm1093 = vcmp.lt.s32.totalorder %v984, 0
    %v1094 = vand.u32 %v984, 2139095040
    %v1095 = vshrl.u32 %v1094, 23
    %v1096 = vsub.s32 %v1095, 127
    %v1097 = vand.u32 2147483647, %v984
    %v1098 = vand.u32 %v1097, 8388607
    %v1099 = vor.u32 %v1098, 8388608
    %v1100 = vsub.s32 0, %v1099
    %v1101 = vadd.s32 %v1096, 1
    %vm1102 = vcmp.gt.s32.totalorder %v1101, 0
    %v1103 = vsel %vm1102, %v1101, 0
    %v1104 = vshrl.u32 %v1103, 5
    %v1105 = vand.u32 %v1103, 31
    %v1106 = vsub.s32 32, %v1105
    %v1107 = vshrl.u32 683565275, %v1106
    %v1108 = vshll.u32 683565275, %v1105
    %v1109 = vshrl.u32 2475754826, %v1106
    %v1110 = vor.u32 %v1108, %v1109
    %v1111 = vshll.u32 2475754826, %v1105
    %v1112 = vshrl.u32 2131351028, %v1106
    %v1113 = vor.u32 %v1111, %v1112
    %v1114 = vshll.u32 2131351028, %v1105
    %v1115 = vshrl.u32 2102212464, %v1106
    %v1116 = vor.u32 %v1114, %v1115
    %v1117 = vshll.u32 2102212464, %v1105
    %v1118 = vshrl.u32 920167782, %v1106
    %v1119 = vor.u32 %v1117, %v1118
    %v1120 = vshll.u32 920167782, %v1105
    %v1121 = vshrl.u32 1326507024, %v1106
    %v1122 = vor.u32 %v1120, %v1121
    %vm1123 = vcmp.lt.s32.totalorder %v1104, 1
    %vm1124 = vcmp.lt.s32.totalorder %v1104, 2
    %vm1125 = vcmp.lt.s32.totalorder %v1104, 3
    %vm1126 = vcmp.lt.s32.totalorder %v1104, 4
    %v1127 = vsel %vm1123, %v1107, %v1110
    %v1128 = vsel %vm1126, %v1116, 2102212464
    %v1129 = vsel %vm1125, %v1113, %v1128
    %v1130 = vsel %vm1124, %v1127, %v1129
    %v1131 = vsel %vm1123, %v1110, %v1113
    %v1132 = vsel %vm1126, %v1119, 920167782
    %v1133 = vsel %vm1125, %v1116, %v1132
    %v1134 = vsel %vm1124, %v1131, %v1133
    %v1135 = vsel %vm1123, %v1113, %v1116
    %v1136 = vsel %vm1126, %v1122, 1326507024
    %v1137 = vsel %vm1125, %v1119, %v1136
    %v1138 = vsel %vm1124, %v1135, %v1137
    %v1139 = vshll.u32 %v1099, 8
    %v1140 = vmul.u32.u64.compose %v1139, %v1138
    %v1141 = vextract.low.u32 %v1140
    %v1142 = vextract.high.u32 %v1140
    %v1143 = vmul.u32.u64.compose %v1139, %v1134
    %v1144 = vextract.low.u32 %v1143
    %v1145 = vextract.high.u32 %v1143
    %v1146 = vmul.u32 %v1139, %v1130
    %v1147 = vadd.s32 %v1142, %v1144
    %vm1148 = vc.u32 %v1142, %v1144
    %v1149 = vadd.s32 %v1145, 1
    %v1150 = vsel %vm1148, %v1149, %v1145
    %v1151 = vadd.s32 %v1146, %v1150
    %v1152 = vadd.s32 %v1151, 536870912
    %v1153 = vshrl.u32 %v1152, 30
    %v1154 = vshll.u32 %v1153, 30
    %v1155 = vsub.s32 %v1151, %v1154
    %vm1156 = vcmp.lt.s32.totalorder %v1155, 0
    %v1157 = vsub.s32 0, %v1155
    %v1158 = vsel %vm1156, %v1157, %v1155
    %v1159 = vclz %v1158
    %v1160 = vsub.s32 %v1159, 2
    %vm1161 = vcmp.gt.s32.totalorder 0, %v1160
    %v1162 = vsel %vm1161, 0, %v1160
    %v1163 = vsub.s32 32, %v1162
    %v1164 = vshll.u32 %v1155, %v1162
    %v1165 = vshrl.u32 %v1147, %v1163
    %v1166 = vor.u32 %v1164, %v1165
    %v1167 = vsub.s32 4294967266, %v1162
    %v1168 = vadd.s32 %v1167, 127
    %v1169 = vshll.u32 %v1168, 23
    %v1170 = vor.u32 4788187, %v1169
    %v1171 = vand.u32 2147483647, %v1170
    %v1173 = vcvt.s32.f32 %v1166
    %v1174 = vmul.f32 %v1173, %v1171
    %v1175 = vxor.u32 %v1174, 2147483648
    %v1176 = vsel %vm1093, %v1175, %v1174
    %v1177 = vsub.s32 4, %v1153
    %v1178 = vsel %vm1093, %v1177, %v1153
    %v1179 = vsel %vm1092, %v984, %v1176
    %v1180 = vsel %vm1092, 0, %v1178
    %v1181 = vcosq.f32.pop %v1179
    %v1182 = vsinq.f32.pop %v1179
    %vm1183 = vweird.f32 %v984
    %v1184 = vand.u32 %v1180, 3
    %vm1185 = vcmp.lt.s32.totalorder %v1184, 2
    %vm1186 = vcmp.eq.s32.totalorder %v1184, 0
    %v1187 = vxor.u32 %v1182, 2147483648
    %v1188 = vsel %vm1186, %v1181, %v1187
    %vm1189 = vcmp.eq.s32.totalorder %v1184, 2
    %v1190 = vxor.u32 %v1181, 2147483648
    %v1191 = vsel %vm1189, %v1190, %v1182
    %v1192 = vsel %vm1185, %v1188, %v1191
    %v1193 = vsel %vm1183, nan, %v1192
    %v1194 = vmul.f32 %v1193, 0.11111111
    %v1195 = vadd.f32 %v972, %v1194
    %1196 = vset.pattern.permute.xlu0 5
    %1197 = vperm.xlu0 %1196, %v65
    %v1198 = vpop.permute.xlu0 %1197
    %v1200 = vmul.f32 %v1198, %v75
    %1201 = vset.pattern.permute.xlu0 5
    %1202 = vperm.xlu0 %1201, %v66
    %v1203 = vpop.permute.xlu0 %1202
    %v1205 = vmul.f32 %v1203, %v85
    %v1206 = vadd.f32 %v1200, %v1205
    %v1207 = vadd.f32 %v1206, %v91
    %v1208 = vand.u32 2147483647, %v1207
    %vm1209 = vcmp.le.f32.partialorder %v1208, 0.7853982
    %vm1210 = vcmp.lt.s32.totalorder %v1207, 0
    %v1211 = vand.u32 %v1207, 2139095040
    %v1212 = vshrl.u32 %v1211, 23
    %v1213 = vsub.s32 %v1212, 127
    %v1214 = vand.u32 2147483647, %v1207
    %v1215 = vand.u32 %v1214, 8388607
    %v1216 = vor.u32 %v1215, 8388608
    %v1217 = vsub.s32 0, %v1216
    %v1218 = vadd.s32 %v1213, 1
    %vm1219 = vcmp.gt.s32.totalorder %v1218, 0
    %v1220 = vsel %vm1219, %v1218, 0
    %v1221 = vshrl.u32 %v1220, 5
    %v1222 = vand.u32 %v1220, 31
    %v1223 = vsub.s32 32, %v1222
    %v1224 = vshrl.u32 683565275, %v1223
    %v1225 = vshll.u32 683565275, %v1222
    %v1226 = vshrl.u32 2475754826, %v1223
    %v1227 = vor.u32 %v1225, %v1226
    %v1228 = vshll.u32 2475754826, %v1222
    %v1229 = vshrl.u32 2131351028, %v1223
    %v1230 = vor.u32 %v1228, %v1229
    %v1231 = vshll.u32 2131351028, %v1222
    %v1232 = vshrl.u32 2102212464, %v1223
    %v1233 = vor.u32 %v1231, %v1232
    %v1234 = vshll.u32 2102212464, %v1222
    %v1235 = vshrl.u32 920167782, %v1223
    %v1236 = vor.u32 %v1234, %v1235
    %v1237 = vshll.u32 920167782, %v1222
    %v1238 = vshrl.u32 1326507024, %v1223
    %v1239 = vor.u32 %v1237, %v1238
    %vm1240 = vcmp.lt.s32.totalorder %v1221, 1
    %vm1241 = vcmp.lt.s32.totalorder %v1221, 2
    %vm1242 = vcmp.lt.s32.totalorder %v1221, 3
    %vm1243 = vcmp.lt.s32.totalorder %v1221, 4
    %v1244 = vsel %vm1240, %v1224, %v1227
    %v1245 = vsel %vm1243, %v1233, 2102212464
    %v1246 = vsel %vm1242, %v1230, %v1245
    %v1247 = vsel %vm1241, %v1244, %v1246
    %v1248 = vsel %vm1240, %v1227, %v1230
    %v1249 = vsel %vm1243, %v1236, 920167782
    %v1250 = vsel %vm1242, %v1233, %v1249
    %v1251 = vsel %vm1241, %v1248, %v1250
    %v1252 = vsel %vm1240, %v1230, %v1233
    %v1253 = vsel %vm1243, %v1239, 1326507024
    %v1254 = vsel %vm1242, %v1236, %v1253
    %v1255 = vsel %vm1241, %v1252, %v1254
    %v1256 = vshll.u32 %v1216, 8
    %v1257 = vmul.u32.u64.compose %v1256, %v1255
    %v1258 = vextract.low.u32 %v1257
    %v1259 = vextract.high.u32 %v1257
    %v1260 = vmul.u32.u64.compose %v1256, %v1251
    %v1261 = vextract.low.u32 %v1260
    %v1262 = vextract.high.u32 %v1260
    %v1263 = vmul.u32 %v1256, %v1247
    %v1264 = vadd.s32 %v1259, %v1261
    %vm1265 = vc.u32 %v1259, %v1261
    %v1266 = vadd.s32 %v1262, 1
    %v1267 = vsel %vm1265, %v1266, %v1262
    %v1268 = vadd.s32 %v1263, %v1267
    %v1269 = vadd.s32 %v1268, 536870912
    %v1270 = vshrl.u32 %v1269, 30
    %v1271 = vshll.u32 %v1270, 30
    %v1272 = vsub.s32 %v1268, %v1271
    %vm1273 = vcmp.lt.s32.totalorder %v1272, 0
    %v1274 = vsub.s32 0, %v1272
    %v1275 = vsel %vm1273, %v1274, %v1272
    %v1276 = vclz %v1275
    %v1277 = vsub.s32 %v1276, 2
    %vm1278 = vcmp.gt.s32.totalorder 0, %v1277
    %v1279 = vsel %vm1278, 0, %v1277
    %v1280 = vsub.s32 32, %v1279
    %v1281 = vshll.u32 %v1272, %v1279
    %v1282 = vshrl.u32 %v1264, %v1280
    %v1283 = vor.u32 %v1281, %v1282
    %v1284 = vsub.s32 4294967266, %v1279
    %v1285 = vadd.s32 %v1284, 127
    %v1286 = vshll.u32 %v1285, 23
    %v1287 = vor.u32 4788187, %v1286
    %v1288 = vand.u32 2147483647, %v1287
    %v1290 = vcvt.s32.f32 %v1283
    %v1291 = vmul.f32 %v1290, %v1288
    %v1292 = vxor.u32 %v1291, 2147483648
    %v1293 = vsel %vm1210, %v1292, %v1291
    %v1294 = vsub.s32 4, %v1270
    %v1295 = vsel %vm1210, %v1294, %v1270
    %v1296 = vsel %vm1209, %v1207, %v1293
    %v1297 = vsel %vm1209, 0, %v1295
    %v1298 = vcosq.f32.pop %v1296
    %v1299 = vsinq.f32.pop %v1296
    %vm1300 = vweird.f32 %v1207
    %v1301 = vadd.s32 %v1297, 3
    %v1302 = vand.u32 %v1301, 3
    %vm1303 = vcmp.lt.s32.totalorder %v1302, 2
    %vm1304 = vcmp.eq.s32.totalorder %v1302, 0
    %v1305 = vxor.u32 %v1299, 2147483648
    %v1306 = vsel %vm1304, %v1298, %v1305
    %vm1307 = vcmp.eq.s32.totalorder %v1302, 2
    %v1308 = vxor.u32 %v1298, 2147483648
    %v1309 = vsel %vm1307, %v1308, %v1299
    %v1310 = vsel %vm1303, %v1306, %v1309
    %v1311 = vsel %vm1300, nan, %v1310
    %v1312 = vmul.f32 %v1311, 0.11111111
    %v1313 = vadd.f32 %v1090, %v1312
    %v1314 = vand.u32 2147483647, %v1207
    %vm1315 = vcmp.le.f32.partialorder %v1314, 0.7853982
    %vm1316 = vcmp.lt.s32.totalorder %v1207, 0
    %v1317 = vand.u32 %v1207, 2139095040
    %v1318 = vshrl.u32 %v1317, 23
    %v1319 = vsub.s32 %v1318, 127
    %v1320 = vand.u32 2147483647, %v1207
    %v1321 = vand.u32 %v1320, 8388607
    %v1322 = vor.u32 %v1321, 8388608
    %v1323 = vsub.s32 0, %v1322
    %v1324 = vadd.s32 %v1319, 1
    %vm1325 = vcmp.gt.s32.totalorder %v1324, 0
    %v1326 = vsel %vm1325, %v1324, 0
    %v1327 = vshrl.u32 %v1326, 5
    %v1328 = vand.u32 %v1326, 31
    %v1329 = vsub.s32 32, %v1328
    %v1330 = vshrl.u32 683565275, %v1329
    %v1331 = vshll.u32 683565275, %v1328
    %v1332 = vshrl.u32 2475754826, %v1329
    %v1333 = vor.u32 %v1331, %v1332
    %v1334 = vshll.u32 2475754826, %v1328
    %v1335 = vshrl.u32 2131351028, %v1329
    %v1336 = vor.u32 %v1334, %v1335
    %v1337 = vshll.u32 2131351028, %v1328
    %v1338 = vshrl.u32 2102212464, %v1329
    %v1339 = vor.u32 %v1337, %v1338
    %v1340 = vshll.u32 2102212464, %v1328
    %v1341 = vshrl.u32 920167782, %v1329
    %v1342 = vor.u32 %v1340, %v1341
    %v1343 = vshll.u32 920167782, %v1328
    %v1344 = vshrl.u32 1326507024, %v1329
    %v1345 = vor.u32 %v1343, %v1344
    %vm1346 = vcmp.lt.s32.totalorder %v1327, 1
    %vm1347 = vcmp.lt.s32.totalorder %v1327, 2
    %vm1348 = vcmp.lt.s32.totalorder %v1327, 3
    %vm1349 = vcmp.lt.s32.totalorder %v1327, 4
    %v1350 = vsel %vm1346, %v1330, %v1333
    %v1351 = vsel %vm1349, %v1339, 2102212464
    %v1352 = vsel %vm1348, %v1336, %v1351
    %v1353 = vsel %vm1347, %v1350, %v1352
    %v1354 = vsel %vm1346, %v1333, %v1336
    %v1355 = vsel %vm1349, %v1342, 920167782
    %v1356 = vsel %vm1348, %v1339, %v1355
    %v1357 = vsel %vm1347, %v1354, %v1356
    %v1358 = vsel %vm1346, %v1336, %v1339
    %v1359 = vsel %vm1349, %v1345, 1326507024
    %v1360 = vsel %vm1348, %v1342, %v1359
    %v1361 = vsel %vm1347, %v1358, %v1360
    %v1362 = vshll.u32 %v1322, 8
    %v1363 = vmul.u32.u64.compose %v1362, %v1361
    %v1364 = vextract.low.u32 %v1363
    %v1365 = vextract.high.u32 %v1363
    %v1366 = vmul.u32.u64.compose %v1362, %v1357
    %v1367 = vextract.low.u32 %v1366
    %v1368 = vextract.high.u32 %v1366
    %v1369 = vmul.u32 %v1362, %v1353
    %v1370 = vadd.s32 %v1365, %v1367
    %vm1371 = vc.u32 %v1365, %v1367
    %v1372 = vadd.s32 %v1368, 1
    %v1373 = vsel %vm1371, %v1372, %v1368
    %v1374 = vadd.s32 %v1369, %v1373
    %v1375 = vadd.s32 %v1374, 536870912
    %v1376 = vshrl.u32 %v1375, 30
    %v1377 = vshll.u32 %v1376, 30
    %v1378 = vsub.s32 %v1374, %v1377
    %vm1379 = vcmp.lt.s32.totalorder %v1378, 0
    %v1380 = vsub.s32 0, %v1378
    %v1381 = vsel %vm1379, %v1380, %v1378
    %v1382 = vclz %v1381
    %v1383 = vsub.s32 %v1382, 2
    %vm1384 = vcmp.gt.s32.totalorder 0, %v1383
    %v1385 = vsel %vm1384, 0, %v1383
    %v1386 = vsub.s32 32, %v1385
    %v1387 = vshll.u32 %v1378, %v1385
    %v1388 = vshrl.u32 %v1370, %v1386
    %v1389 = vor.u32 %v1387, %v1388
    %v1390 = vsub.s32 4294967266, %v1385
    %v1391 = vadd.s32 %v1390, 127
    %v1392 = vshll.u32 %v1391, 23
    %v1393 = vor.u32 4788187, %v1392
    %v1394 = vand.u32 2147483647, %v1393
    %v1396 = vcvt.s32.f32 %v1389
    %v1397 = vmul.f32 %v1396, %v1394
    %v1398 = vxor.u32 %v1397, 2147483648
    %v1399 = vsel %vm1316, %v1398, %v1397
    %v1400 = vsub.s32 4, %v1376
    %v1401 = vsel %vm1316, %v1400, %v1376
    %v1402 = vsel %vm1315, %v1207, %v1399
    %v1403 = vsel %vm1315, 0, %v1401
    %v1404 = vcosq.f32.pop %v1402
    %v1405 = vsinq.f32.pop %v1402
    %vm1406 = vweird.f32 %v1207
    %v1407 = vand.u32 %v1403, 3
    %vm1408 = vcmp.lt.s32.totalorder %v1407, 2
    %vm1409 = vcmp.eq.s32.totalorder %v1407, 0
    %v1410 = vxor.u32 %v1405, 2147483648
    %v1411 = vsel %vm1409, %v1404, %v1410
    %vm1412 = vcmp.eq.s32.totalorder %v1407, 2
    %v1413 = vxor.u32 %v1404, 2147483648
    %v1414 = vsel %vm1412, %v1413, %v1405
    %v1415 = vsel %vm1408, %v1411, %v1414
    %v1416 = vsel %vm1406, nan, %v1415
    %v1417 = vmul.f32 %v1416, 0.11111111
    %v1418 = vadd.f32 %v1195, %v1417
    %1419 = vset.pattern.permute.xlu0 6
    %1420 = vperm.xlu0 %1419, %v65
    %v1421 = vpop.permute.xlu0 %1420
    %v1423 = vmul.f32 %v1421, %v75
    %1424 = vset.pattern.permute.xlu0 6
    %1425 = vperm.xlu0 %1424, %v66
    %v1426 = vpop.permute.xlu0 %1425
    %v1428 = vmul.f32 %v1426, %v85
    %v1429 = vadd.f32 %v1423, %v1428
    %v1430 = vadd.f32 %v1429, %v91
    %v1431 = vand.u32 2147483647, %v1430
    %vm1432 = vcmp.le.f32.partialorder %v1431, 0.7853982
    %vm1433 = vcmp.lt.s32.totalorder %v1430, 0
    %v1434 = vand.u32 %v1430, 2139095040
    %v1435 = vshrl.u32 %v1434, 23
    %v1436 = vsub.s32 %v1435, 127
    %v1437 = vand.u32 2147483647, %v1430
    %v1438 = vand.u32 %v1437, 8388607
    %v1439 = vor.u32 %v1438, 8388608
    %v1440 = vsub.s32 0, %v1439
    %v1441 = vadd.s32 %v1436, 1
    %vm1442 = vcmp.gt.s32.totalorder %v1441, 0
    %v1443 = vsel %vm1442, %v1441, 0
    %v1444 = vshrl.u32 %v1443, 5
    %v1445 = vand.u32 %v1443, 31
    %v1446 = vsub.s32 32, %v1445
    %v1447 = vshrl.u32 683565275, %v1446
    %v1448 = vshll.u32 683565275, %v1445
    %v1449 = vshrl.u32 2475754826, %v1446
    %v1450 = vor.u32 %v1448, %v1449
    %v1451 = vshll.u32 2475754826, %v1445
    %v1452 = vshrl.u32 2131351028, %v1446
    %v1453 = vor.u32 %v1451, %v1452
    %v1454 = vshll.u32 2131351028, %v1445
    %v1455 = vshrl.u32 2102212464, %v1446
    %v1456 = vor.u32 %v1454, %v1455
    %v1457 = vshll.u32 2102212464, %v1445
    %v1458 = vshrl.u32 920167782, %v1446
    %v1459 = vor.u32 %v1457, %v1458
    %v1460 = vshll.u32 920167782, %v1445
    %v1461 = vshrl.u32 1326507024, %v1446
    %v1462 = vor.u32 %v1460, %v1461
    %vm1463 = vcmp.lt.s32.totalorder %v1444, 1
    %vm1464 = vcmp.lt.s32.totalorder %v1444, 2
    %vm1465 = vcmp.lt.s32.totalorder %v1444, 3
    %vm1466 = vcmp.lt.s32.totalorder %v1444, 4
    %v1467 = vsel %vm1463, %v1447, %v1450
    %v1468 = vsel %vm1466, %v1456, 2102212464
    %v1469 = vsel %vm1465, %v1453, %v1468
    %v1470 = vsel %vm1464, %v1467, %v1469
    %v1471 = vsel %vm1463, %v1450, %v1453
    %v1472 = vsel %vm1466, %v1459, 920167782
    %v1473 = vsel %vm1465, %v1456, %v1472
    %v1474 = vsel %vm1464, %v1471, %v1473
    %v1475 = vsel %vm1463, %v1453, %v1456
    %v1476 = vsel %vm1466, %v1462, 1326507024
    %v1477 = vsel %vm1465, %v1459, %v1476
    %v1478 = vsel %vm1464, %v1475, %v1477
    %v1479 = vshll.u32 %v1439, 8
    %v1480 = vmul.u32.u64.compose %v1479, %v1478
    %v1481 = vextract.low.u32 %v1480
    %v1482 = vextract.high.u32 %v1480
    %v1483 = vmul.u32.u64.compose %v1479, %v1474
    %v1484 = vextract.low.u32 %v1483
    %v1485 = vextract.high.u32 %v1483
    %v1486 = vmul.u32 %v1479, %v1470
    %v1487 = vadd.s32 %v1482, %v1484
    %vm1488 = vc.u32 %v1482, %v1484
    %v1489 = vadd.s32 %v1485, 1
    %v1490 = vsel %vm1488, %v1489, %v1485
    %v1491 = vadd.s32 %v1486, %v1490
    %v1492 = vadd.s32 %v1491, 536870912
    %v1493 = vshrl.u32 %v1492, 30
    %v1494 = vshll.u32 %v1493, 30
    %v1495 = vsub.s32 %v1491, %v1494
    %vm1496 = vcmp.lt.s32.totalorder %v1495, 0
    %v1497 = vsub.s32 0, %v1495
    %v1498 = vsel %vm1496, %v1497, %v1495
    %v1499 = vclz %v1498
    %v1500 = vsub.s32 %v1499, 2
    %vm1501 = vcmp.gt.s32.totalorder 0, %v1500
    %v1502 = vsel %vm1501, 0, %v1500
    %v1503 = vsub.s32 32, %v1502
    %v1504 = vshll.u32 %v1495, %v1502
    %v1505 = vshrl.u32 %v1487, %v1503
    %v1506 = vor.u32 %v1504, %v1505
    %v1507 = vsub.s32 4294967266, %v1502
    %v1508 = vadd.s32 %v1507, 127
    %v1509 = vshll.u32 %v1508, 23
    %v1510 = vor.u32 4788187, %v1509
    %v1511 = vand.u32 2147483647, %v1510
    %v1513 = vcvt.s32.f32 %v1506
    %v1514 = vmul.f32 %v1513, %v1511
    %v1515 = vxor.u32 %v1514, 2147483648
    %v1516 = vsel %vm1433, %v1515, %v1514
    %v1517 = vsub.s32 4, %v1493
    %v1518 = vsel %vm1433, %v1517, %v1493
    %v1519 = vsel %vm1432, %v1430, %v1516
    %v1520 = vsel %vm1432, 0, %v1518
    %v1521 = vcosq.f32.pop %v1519
    %v1522 = vsinq.f32.pop %v1519
    %vm1523 = vweird.f32 %v1430
    %v1524 = vadd.s32 %v1520, 3
    %v1525 = vand.u32 %v1524, 3
    %vm1526 = vcmp.lt.s32.totalorder %v1525, 2
    %vm1527 = vcmp.eq.s32.totalorder %v1525, 0
    %v1528 = vxor.u32 %v1522, 2147483648
    %v1529 = vsel %vm1527, %v1521, %v1528
    %vm1530 = vcmp.eq.s32.totalorder %v1525, 2
    %v1531 = vxor.u32 %v1521, 2147483648
    %v1532 = vsel %vm1530, %v1531, %v1522
    %v1533 = vsel %vm1526, %v1529, %v1532
    %v1534 = vsel %vm1523, nan, %v1533
    %v1535 = vmul.f32 %v1534, 0.11111111
    %v1536 = vadd.f32 %v1313, %v1535
    %v1537 = vand.u32 2147483647, %v1430
    %vm1538 = vcmp.le.f32.partialorder %v1537, 0.7853982
    %vm1539 = vcmp.lt.s32.totalorder %v1430, 0
    %v1540 = vand.u32 %v1430, 2139095040
    %v1541 = vshrl.u32 %v1540, 23
    %v1542 = vsub.s32 %v1541, 127
    %v1543 = vand.u32 2147483647, %v1430
    %v1544 = vand.u32 %v1543, 8388607
    %v1545 = vor.u32 %v1544, 8388608
    %v1546 = vsub.s32 0, %v1545
    %v1547 = vadd.s32 %v1542, 1
    %vm1548 = vcmp.gt.s32.totalorder %v1547, 0
    %v1549 = vsel %vm1548, %v1547, 0
    %v1550 = vshrl.u32 %v1549, 5
    %v1551 = vand.u32 %v1549, 31
    %v1552 = vsub.s32 32, %v1551
    %v1553 = vshrl.u32 683565275, %v1552
    %v1554 = vshll.u32 683565275, %v1551
    %v1555 = vshrl.u32 2475754826, %v1552
    %v1556 = vor.u32 %v1554, %v1555
    %v1557 = vshll.u32 2475754826, %v1551
    %v1558 = vshrl.u32 2131351028, %v1552
    %v1559 = vor.u32 %v1557, %v1558
    %v1560 = vshll.u32 2131351028, %v1551
    %v1561 = vshrl.u32 2102212464, %v1552
    %v1562 = vor.u32 %v1560, %v1561
    %v1563 = vshll.u32 2102212464, %v1551
    %v1564 = vshrl.u32 920167782, %v1552
    %v1565 = vor.u32 %v1563, %v1564
    %v1566 = vshll.u32 920167782, %v1551
    %v1567 = vshrl.u32 1326507024, %v1552
    %v1568 = vor.u32 %v1566, %v1567
    %vm1569 = vcmp.lt.s32.totalorder %v1550, 1
    %vm1570 = vcmp.lt.s32.totalorder %v1550, 2
    %vm1571 = vcmp.lt.s32.totalorder %v1550, 3
    %vm1572 = vcmp.lt.s32.totalorder %v1550, 4
    %v1573 = vsel %vm1569, %v1553, %v1556
    %v1574 = vsel %vm1572, %v1562, 2102212464
    %v1575 = vsel %vm1571, %v1559, %v1574
    %v1576 = vsel %vm1570, %v1573, %v1575
    %v1577 = vsel %vm1569, %v1556, %v1559
    %v1578 = vsel %vm1572, %v1565, 920167782
    %v1579 = vsel %vm1571, %v1562, %v1578
    %v1580 = vsel %vm1570, %v1577, %v1579
    %v1581 = vsel %vm1569, %v1559, %v1562
    %v1582 = vsel %vm1572, %v1568, 1326507024
    %v1583 = vsel %vm1571, %v1565, %v1582
    %v1584 = vsel %vm1570, %v1581, %v1583
    %v1585 = vshll.u32 %v1545, 8
    %v1586 = vmul.u32.u64.compose %v1585, %v1584
    %v1587 = vextract.low.u32 %v1586
    %v1588 = vextract.high.u32 %v1586
    %v1589 = vmul.u32.u64.compose %v1585, %v1580
    %v1590 = vextract.low.u32 %v1589
    %v1591 = vextract.high.u32 %v1589
    %v1592 = vmul.u32 %v1585, %v1576
    %v1593 = vadd.s32 %v1588, %v1590
    %vm1594 = vc.u32 %v1588, %v1590
    %v1595 = vadd.s32 %v1591, 1
    %v1596 = vsel %vm1594, %v1595, %v1591
    %v1597 = vadd.s32 %v1592, %v1596
    %v1598 = vadd.s32 %v1597, 536870912
    %v1599 = vshrl.u32 %v1598, 30
    %v1600 = vshll.u32 %v1599, 30
    %v1601 = vsub.s32 %v1597, %v1600
    %vm1602 = vcmp.lt.s32.totalorder %v1601, 0
    %v1603 = vsub.s32 0, %v1601
    %v1604 = vsel %vm1602, %v1603, %v1601
    %v1605 = vclz %v1604
    %v1606 = vsub.s32 %v1605, 2
    %vm1607 = vcmp.gt.s32.totalorder 0, %v1606
    %v1608 = vsel %vm1607, 0, %v1606
    %v1609 = vsub.s32 32, %v1608
    %v1610 = vshll.u32 %v1601, %v1608
    %v1611 = vshrl.u32 %v1593, %v1609
    %v1612 = vor.u32 %v1610, %v1611
    %v1613 = vsub.s32 4294967266, %v1608
    %v1614 = vadd.s32 %v1613, 127
    %v1615 = vshll.u32 %v1614, 23
    %v1616 = vor.u32 4788187, %v1615
    %v1617 = vand.u32 2147483647, %v1616
    %v1619 = vcvt.s32.f32 %v1612
    %v1620 = vmul.f32 %v1619, %v1617
    %v1621 = vxor.u32 %v1620, 2147483648
    %v1622 = vsel %vm1539, %v1621, %v1620
    %v1623 = vsub.s32 4, %v1599
    %v1624 = vsel %vm1539, %v1623, %v1599
    %v1625 = vsel %vm1538, %v1430, %v1622
    %v1626 = vsel %vm1538, 0, %v1624
    %v1627 = vcosq.f32.pop %v1625
    %v1628 = vsinq.f32.pop %v1625
    %vm1629 = vweird.f32 %v1430
    %v1630 = vand.u32 %v1626, 3
    %vm1631 = vcmp.lt.s32.totalorder %v1630, 2
    %vm1632 = vcmp.eq.s32.totalorder %v1630, 0
    %v1633 = vxor.u32 %v1628, 2147483648
    %v1634 = vsel %vm1632, %v1627, %v1633
    %vm1635 = vcmp.eq.s32.totalorder %v1630, 2
    %v1636 = vxor.u32 %v1627, 2147483648
    %v1637 = vsel %vm1635, %v1636, %v1628
    %v1638 = vsel %vm1631, %v1634, %v1637
    %v1639 = vsel %vm1629, nan, %v1638
    %v1640 = vmul.f32 %v1639, 0.11111111
    %v1641 = vadd.f32 %v1418, %v1640
    %1642 = vset.pattern.permute.xlu0 7
    %1643 = vperm.xlu0 %1642, %v65
    %v1644 = vpop.permute.xlu0 %1643
    %v1646 = vmul.f32 %v1644, %v75
    %1647 = vset.pattern.permute.xlu0 7
    %1648 = vperm.xlu0 %1647, %v66
    %v1649 = vpop.permute.xlu0 %1648
    %v1651 = vmul.f32 %v1649, %v85
    %v1652 = vadd.f32 %v1646, %v1651
    %v1653 = vadd.f32 %v1652, %v91
    %v1654 = vand.u32 2147483647, %v1653
    %vm1655 = vcmp.le.f32.partialorder %v1654, 0.7853982
    %vm1656 = vcmp.lt.s32.totalorder %v1653, 0
    %v1657 = vand.u32 %v1653, 2139095040
    %v1658 = vshrl.u32 %v1657, 23
    %v1659 = vsub.s32 %v1658, 127
    %v1660 = vand.u32 2147483647, %v1653
    %v1661 = vand.u32 %v1660, 8388607
    %v1662 = vor.u32 %v1661, 8388608
    %v1663 = vsub.s32 0, %v1662
    %v1664 = vadd.s32 %v1659, 1
    %vm1665 = vcmp.gt.s32.totalorder %v1664, 0
    %v1666 = vsel %vm1665, %v1664, 0
    %v1667 = vshrl.u32 %v1666, 5
    %v1668 = vand.u32 %v1666, 31
    %v1669 = vsub.s32 32, %v1668
    %v1670 = vshrl.u32 683565275, %v1669
    %v1671 = vshll.u32 683565275, %v1668
    %v1672 = vshrl.u32 2475754826, %v1669
    %v1673 = vor.u32 %v1671, %v1672
    %v1674 = vshll.u32 2475754826, %v1668
    %v1675 = vshrl.u32 2131351028, %v1669
    %v1676 = vor.u32 %v1674, %v1675
    %v1677 = vshll.u32 2131351028, %v1668
    %v1678 = vshrl.u32 2102212464, %v1669
    %v1679 = vor.u32 %v1677, %v1678
    %v1680 = vshll.u32 2102212464, %v1668
    %v1681 = vshrl.u32 920167782, %v1669
    %v1682 = vor.u32 %v1680, %v1681
    %v1683 = vshll.u32 920167782, %v1668
    %v1684 = vshrl.u32 1326507024, %v1669
    %v1685 = vor.u32 %v1683, %v1684
    %vm1686 = vcmp.lt.s32.totalorder %v1667, 1
    %vm1687 = vcmp.lt.s32.totalorder %v1667, 2
    %vm1688 = vcmp.lt.s32.totalorder %v1667, 3
    %vm1689 = vcmp.lt.s32.totalorder %v1667, 4
    %v1690 = vsel %vm1686, %v1670, %v1673
    %v1691 = vsel %vm1689, %v1679, 2102212464
    %v1692 = vsel %vm1688, %v1676, %v1691
    %v1693 = vsel %vm1687, %v1690, %v1692
    %v1694 = vsel %vm1686, %v1673, %v1676
    %v1695 = vsel %vm1689, %v1682, 920167782
    %v1696 = vsel %vm1688, %v1679, %v1695
    %v1697 = vsel %vm1687, %v1694, %v1696
    %v1698 = vsel %vm1686, %v1676, %v1679
    %v1699 = vsel %vm1689, %v1685, 1326507024
    %v1700 = vsel %vm1688, %v1682, %v1699
    %v1701 = vsel %vm1687, %v1698, %v1700
    %v1702 = vshll.u32 %v1662, 8
    %v1703 = vmul.u32.u64.compose %v1702, %v1701
    %v1704 = vextract.low.u32 %v1703
    %v1705 = vextract.high.u32 %v1703
    %v1706 = vmul.u32.u64.compose %v1702, %v1697
    %v1707 = vextract.low.u32 %v1706
    %v1708 = vextract.high.u32 %v1706
    %v1709 = vmul.u32 %v1702, %v1693
    %v1710 = vadd.s32 %v1705, %v1707
    %vm1711 = vc.u32 %v1705, %v1707
    %v1712 = vadd.s32 %v1708, 1
    %v1713 = vsel %vm1711, %v1712, %v1708
    %v1714 = vadd.s32 %v1709, %v1713
    %v1715 = vadd.s32 %v1714, 536870912
    %v1716 = vshrl.u32 %v1715, 30
    %v1717 = vshll.u32 %v1716, 30
    %v1718 = vsub.s32 %v1714, %v1717
    %vm1719 = vcmp.lt.s32.totalorder %v1718, 0
    %v1720 = vsub.s32 0, %v1718
    %v1721 = vsel %vm1719, %v1720, %v1718
    %v1722 = vclz %v1721
    %v1723 = vsub.s32 %v1722, 2
    %vm1724 = vcmp.gt.s32.totalorder 0, %v1723
    %v1725 = vsel %vm1724, 0, %v1723
    %v1726 = vsub.s32 32, %v1725
    %v1727 = vshll.u32 %v1718, %v1725
    %v1728 = vshrl.u32 %v1710, %v1726
    %v1729 = vor.u32 %v1727, %v1728
    %v1730 = vsub.s32 4294967266, %v1725
    %v1731 = vadd.s32 %v1730, 127
    %v1732 = vshll.u32 %v1731, 23
    %v1733 = vor.u32 4788187, %v1732
    %v1734 = vand.u32 2147483647, %v1733
    %v1736 = vcvt.s32.f32 %v1729
    %v1737 = vmul.f32 %v1736, %v1734
    %v1738 = vxor.u32 %v1737, 2147483648
    %v1739 = vsel %vm1656, %v1738, %v1737
    %v1740 = vsub.s32 4, %v1716
    %v1741 = vsel %vm1656, %v1740, %v1716
    %v1742 = vsel %vm1655, %v1653, %v1739
    %v1743 = vsel %vm1655, 0, %v1741
    %v1744 = vcosq.f32.pop %v1742
    %v1745 = vsinq.f32.pop %v1742
    %vm1746 = vweird.f32 %v1653
    %v1747 = vadd.s32 %v1743, 3
    %v1748 = vand.u32 %v1747, 3
    %vm1749 = vcmp.lt.s32.totalorder %v1748, 2
    %vm1750 = vcmp.eq.s32.totalorder %v1748, 0
    %v1751 = vxor.u32 %v1745, 2147483648
    %v1752 = vsel %vm1750, %v1744, %v1751
    %vm1753 = vcmp.eq.s32.totalorder %v1748, 2
    %v1754 = vxor.u32 %v1744, 2147483648
    %v1755 = vsel %vm1753, %v1754, %v1745
    %v1756 = vsel %vm1749, %v1752, %v1755
    %v1757 = vsel %vm1746, nan, %v1756
    %v1758 = vmul.f32 %v1757, 0.11111111
    %v1759 = vadd.f32 %v1536, %v1758
    %v1760 = vand.u32 2147483647, %v1653
    %vm1761 = vcmp.le.f32.partialorder %v1760, 0.7853982
    %vm1762 = vcmp.lt.s32.totalorder %v1653, 0
    %v1763 = vand.u32 %v1653, 2139095040
    %v1764 = vshrl.u32 %v1763, 23
    %v1765 = vsub.s32 %v1764, 127
    %v1766 = vand.u32 2147483647, %v1653
    %v1767 = vand.u32 %v1766, 8388607
    %v1768 = vor.u32 %v1767, 8388608
    %v1769 = vsub.s32 0, %v1768
    %v1770 = vadd.s32 %v1765, 1
    %vm1771 = vcmp.gt.s32.totalorder %v1770, 0
    %v1772 = vsel %vm1771, %v1770, 0
    %v1773 = vshrl.u32 %v1772, 5
    %v1774 = vand.u32 %v1772, 31
    %v1775 = vsub.s32 32, %v1774
    %v1776 = vshrl.u32 683565275, %v1775
    %v1777 = vshll.u32 683565275, %v1774
    %v1778 = vshrl.u32 2475754826, %v1775
    %v1779 = vor.u32 %v1777, %v1778
    %v1780 = vshll.u32 2475754826, %v1774
    %v1781 = vshrl.u32 2131351028, %v1775
    %v1782 = vor.u32 %v1780, %v1781
    %v1783 = vshll.u32 2131351028, %v1774
    %v1784 = vshrl.u32 2102212464, %v1775
    %v1785 = vor.u32 %v1783, %v1784
    %v1786 = vshll.u32 2102212464, %v1774
    %v1787 = vshrl.u32 920167782, %v1775
    %v1788 = vor.u32 %v1786, %v1787
    %v1789 = vshll.u32 920167782, %v1774
    %v1790 = vshrl.u32 1326507024, %v1775
    %v1791 = vor.u32 %v1789, %v1790
    %vm1792 = vcmp.lt.s32.totalorder %v1773, 1
    %vm1793 = vcmp.lt.s32.totalorder %v1773, 2
    %vm1794 = vcmp.lt.s32.totalorder %v1773, 3
    %vm1795 = vcmp.lt.s32.totalorder %v1773, 4
    %v1796 = vsel %vm1792, %v1776, %v1779
    %v1797 = vsel %vm1795, %v1785, 2102212464
    %v1798 = vsel %vm1794, %v1782, %v1797
    %v1799 = vsel %vm1793, %v1796, %v1798
    %v1800 = vsel %vm1792, %v1779, %v1782
    %v1801 = vsel %vm1795, %v1788, 920167782
    %v1802 = vsel %vm1794, %v1785, %v1801
    %v1803 = vsel %vm1793, %v1800, %v1802
    %v1804 = vsel %vm1792, %v1782, %v1785
    %v1805 = vsel %vm1795, %v1791, 1326507024
    %v1806 = vsel %vm1794, %v1788, %v1805
    %v1807 = vsel %vm1793, %v1804, %v1806
    %v1808 = vshll.u32 %v1768, 8
    %v1809 = vmul.u32.u64.compose %v1808, %v1807
    %v1810 = vextract.low.u32 %v1809
    %v1811 = vextract.high.u32 %v1809
    %v1812 = vmul.u32.u64.compose %v1808, %v1803
    %v1813 = vextract.low.u32 %v1812
    %v1814 = vextract.high.u32 %v1812
    %v1815 = vmul.u32 %v1808, %v1799
    %v1816 = vadd.s32 %v1811, %v1813
    %vm1817 = vc.u32 %v1811, %v1813
    %v1818 = vadd.s32 %v1814, 1
    %v1819 = vsel %vm1817, %v1818, %v1814
    %v1820 = vadd.s32 %v1815, %v1819
    %v1821 = vadd.s32 %v1820, 536870912
    %v1822 = vshrl.u32 %v1821, 30
    %v1823 = vshll.u32 %v1822, 30
    %v1824 = vsub.s32 %v1820, %v1823
    %vm1825 = vcmp.lt.s32.totalorder %v1824, 0
    %v1826 = vsub.s32 0, %v1824
    %v1827 = vsel %vm1825, %v1826, %v1824
    %v1828 = vclz %v1827
    %v1829 = vsub.s32 %v1828, 2
    %vm1830 = vcmp.gt.s32.totalorder 0, %v1829
    %v1831 = vsel %vm1830, 0, %v1829
    %v1832 = vsub.s32 32, %v1831
    %v1833 = vshll.u32 %v1824, %v1831
    %v1834 = vshrl.u32 %v1816, %v1832
    %v1835 = vor.u32 %v1833, %v1834
    %v1836 = vsub.s32 4294967266, %v1831
    %v1837 = vadd.s32 %v1836, 127
    %v1838 = vshll.u32 %v1837, 23
    %v1839 = vor.u32 4788187, %v1838
    %v1840 = vand.u32 2147483647, %v1839
    %v1842 = vcvt.s32.f32 %v1835
    %v1843 = vmul.f32 %v1842, %v1840
    %v1844 = vxor.u32 %v1843, 2147483648
    %v1845 = vsel %vm1762, %v1844, %v1843
    %v1846 = vsub.s32 4, %v1822
    %v1847 = vsel %vm1762, %v1846, %v1822
    %v1848 = vsel %vm1761, %v1653, %v1845
    %v1849 = vsel %vm1761, 0, %v1847
    %v1850 = vcosq.f32.pop %v1848
    %v1851 = vsinq.f32.pop %v1848
    %vm1852 = vweird.f32 %v1653
    %v1853 = vand.u32 %v1849, 3
    %vm1854 = vcmp.lt.s32.totalorder %v1853, 2
    %vm1855 = vcmp.eq.s32.totalorder %v1853, 0
    %v1856 = vxor.u32 %v1851, 2147483648
    %v1857 = vsel %vm1855, %v1850, %v1856
    %vm1858 = vcmp.eq.s32.totalorder %v1853, 2
    %v1859 = vxor.u32 %v1850, 2147483648
    %v1860 = vsel %vm1858, %v1859, %v1851
    %v1861 = vsel %vm1854, %v1857, %v1860
    %v1862 = vsel %vm1852, nan, %v1861
    %v1863 = vmul.f32 %v1862, 0.11111111
    %v1864 = vadd.f32 %v1641, %v1863
    %1865 = vset.pattern.permute.xlu0 8
    %1866 = vperm.xlu0 %1865, %v65
    %v1867 = vpop.permute.xlu0 %1866
    %v1869 = vmul.f32 %v1867, %v75
    %1870 = vset.pattern.permute.xlu0 8
    %1871 = vperm.xlu0 %1870, %v66
    %v1872 = vpop.permute.xlu0 %1871
    %v1874 = vmul.f32 %v1872, %v85
    %v1875 = vadd.f32 %v1869, %v1874
    %v1876 = vadd.f32 %v1875, %v91
    %v1877 = vand.u32 2147483647, %v1876
    %vm1878 = vcmp.le.f32.partialorder %v1877, 0.7853982
    %vm1879 = vcmp.lt.s32.totalorder %v1876, 0
    %v1880 = vand.u32 %v1876, 2139095040
    %v1881 = vshrl.u32 %v1880, 23
    %v1882 = vsub.s32 %v1881, 127
    %v1883 = vand.u32 2147483647, %v1876
    %v1884 = vand.u32 %v1883, 8388607
    %v1885 = vor.u32 %v1884, 8388608
    %v1886 = vsub.s32 0, %v1885
    %v1887 = vadd.s32 %v1882, 1
    %vm1888 = vcmp.gt.s32.totalorder %v1887, 0
    %v1889 = vsel %vm1888, %v1887, 0
    %v1890 = vshrl.u32 %v1889, 5
    %v1891 = vand.u32 %v1889, 31
    %v1892 = vsub.s32 32, %v1891
    %v1893 = vshrl.u32 683565275, %v1892
    %v1894 = vshll.u32 683565275, %v1891
    %v1895 = vshrl.u32 2475754826, %v1892
    %v1896 = vor.u32 %v1894, %v1895
    %v1897 = vshll.u32 2475754826, %v1891
    %v1898 = vshrl.u32 2131351028, %v1892
    %v1899 = vor.u32 %v1897, %v1898
    %v1900 = vshll.u32 2131351028, %v1891
    %v1901 = vshrl.u32 2102212464, %v1892
    %v1902 = vor.u32 %v1900, %v1901
    %v1903 = vshll.u32 2102212464, %v1891
    %v1904 = vshrl.u32 920167782, %v1892
    %v1905 = vor.u32 %v1903, %v1904
    %v1906 = vshll.u32 920167782, %v1891
    %v1907 = vshrl.u32 1326507024, %v1892
    %v1908 = vor.u32 %v1906, %v1907
    %vm1909 = vcmp.lt.s32.totalorder %v1890, 1
    %vm1910 = vcmp.lt.s32.totalorder %v1890, 2
    %vm1911 = vcmp.lt.s32.totalorder %v1890, 3
    %vm1912 = vcmp.lt.s32.totalorder %v1890, 4
    %v1913 = vsel %vm1909, %v1893, %v1896
    %v1914 = vsel %vm1912, %v1902, 2102212464
    %v1915 = vsel %vm1911, %v1899, %v1914
    %v1916 = vsel %vm1910, %v1913, %v1915
    %v1917 = vsel %vm1909, %v1896, %v1899
    %v1918 = vsel %vm1912, %v1905, 920167782
    %v1919 = vsel %vm1911, %v1902, %v1918
    %v1920 = vsel %vm1910, %v1917, %v1919
    %v1921 = vsel %vm1909, %v1899, %v1902
    %v1922 = vsel %vm1912, %v1908, 1326507024
    %v1923 = vsel %vm1911, %v1905, %v1922
    %v1924 = vsel %vm1910, %v1921, %v1923
    %v1925 = vshll.u32 %v1885, 8
    %v1926 = vmul.u32.u64.compose %v1925, %v1924
    %v1927 = vextract.low.u32 %v1926
    %v1928 = vextract.high.u32 %v1926
    %v1929 = vmul.u32.u64.compose %v1925, %v1920
    %v1930 = vextract.low.u32 %v1929
    %v1931 = vextract.high.u32 %v1929
    %v1932 = vmul.u32 %v1925, %v1916
    %v1933 = vadd.s32 %v1928, %v1930
    %vm1934 = vc.u32 %v1928, %v1930
    %v1935 = vadd.s32 %v1931, 1
    %v1936 = vsel %vm1934, %v1935, %v1931
    %v1937 = vadd.s32 %v1932, %v1936
    %v1938 = vadd.s32 %v1937, 536870912
    %v1939 = vshrl.u32 %v1938, 30
    %v1940 = vshll.u32 %v1939, 30
    %v1941 = vsub.s32 %v1937, %v1940
    %vm1942 = vcmp.lt.s32.totalorder %v1941, 0
    %v1943 = vsub.s32 0, %v1941
    %v1944 = vsel %vm1942, %v1943, %v1941
    %v1945 = vclz %v1944
    %v1946 = vsub.s32 %v1945, 2
    %vm1947 = vcmp.gt.s32.totalorder 0, %v1946
    %v1948 = vsel %vm1947, 0, %v1946
    %v1949 = vsub.s32 32, %v1948
    %v1950 = vshll.u32 %v1941, %v1948
    %v1951 = vshrl.u32 %v1933, %v1949
    %v1952 = vor.u32 %v1950, %v1951
    %v1953 = vsub.s32 4294967266, %v1948
    %v1954 = vadd.s32 %v1953, 127
    %v1955 = vshll.u32 %v1954, 23
    %v1956 = vor.u32 4788187, %v1955
    %v1957 = vand.u32 2147483647, %v1956
    %v1959 = vcvt.s32.f32 %v1952
    %v1960 = vmul.f32 %v1959, %v1957
    %v1961 = vxor.u32 %v1960, 2147483648
    %v1962 = vsel %vm1879, %v1961, %v1960
    %v1963 = vsub.s32 4, %v1939
    %v1964 = vsel %vm1879, %v1963, %v1939
    %v1965 = vsel %vm1878, %v1876, %v1962
    %v1966 = vsel %vm1878, 0, %v1964
    %v1967 = vcosq.f32.pop %v1965
    %v1968 = vsinq.f32.pop %v1965
    %vm1969 = vweird.f32 %v1876
    %v1970 = vadd.s32 %v1966, 3
    %v1971 = vand.u32 %v1970, 3
    %vm1972 = vcmp.lt.s32.totalorder %v1971, 2
    %vm1973 = vcmp.eq.s32.totalorder %v1971, 0
    %v1974 = vxor.u32 %v1968, 2147483648
    %v1975 = vsel %vm1973, %v1967, %v1974
    %vm1976 = vcmp.eq.s32.totalorder %v1971, 2
    %v1977 = vxor.u32 %v1967, 2147483648
    %v1978 = vsel %vm1976, %v1977, %v1968
    %v1979 = vsel %vm1972, %v1975, %v1978
    %v1980 = vsel %vm1969, nan, %v1979
    %v1981 = vmul.f32 %v1980, 0.055555556
    %v1982 = vadd.f32 %v1759, %v1981
    %v1983 = vand.u32 2147483647, %v1876
    %vm1984 = vcmp.le.f32.partialorder %v1983, 0.7853982
    %vm1985 = vcmp.lt.s32.totalorder %v1876, 0
    %v1986 = vand.u32 %v1876, 2139095040
    %v1987 = vshrl.u32 %v1986, 23
    %v1988 = vsub.s32 %v1987, 127
    %v1989 = vand.u32 2147483647, %v1876
    %v1990 = vand.u32 %v1989, 8388607
    %v1991 = vor.u32 %v1990, 8388608
    %v1992 = vsub.s32 0, %v1991
    %v1993 = vadd.s32 %v1988, 1
    %vm1994 = vcmp.gt.s32.totalorder %v1993, 0
    %v1995 = vsel %vm1994, %v1993, 0
    %v1996 = vshrl.u32 %v1995, 5
    %v1997 = vand.u32 %v1995, 31
    %v1998 = vsub.s32 32, %v1997
    %v1999 = vshrl.u32 683565275, %v1998
    %v2000 = vshll.u32 683565275, %v1997
    %v2001 = vshrl.u32 2475754826, %v1998
    %v2002 = vor.u32 %v2000, %v2001
    %v2003 = vshll.u32 2475754826, %v1997
    %v2004 = vshrl.u32 2131351028, %v1998
    %v2005 = vor.u32 %v2003, %v2004
    %v2006 = vshll.u32 2131351028, %v1997
    %v2007 = vshrl.u32 2102212464, %v1998
    %v2008 = vor.u32 %v2006, %v2007
    %v2009 = vshll.u32 2102212464, %v1997
    %v2010 = vshrl.u32 920167782, %v1998
    %v2011 = vor.u32 %v2009, %v2010
    %v2012 = vshll.u32 920167782, %v1997
    %v2013 = vshrl.u32 1326507024, %v1998
    %v2014 = vor.u32 %v2012, %v2013
    %vm2015 = vcmp.lt.s32.totalorder %v1996, 1
    %vm2016 = vcmp.lt.s32.totalorder %v1996, 2
    %vm2017 = vcmp.lt.s32.totalorder %v1996, 3
    %vm2018 = vcmp.lt.s32.totalorder %v1996, 4
    %v2019 = vsel %vm2015, %v1999, %v2002
    %v2020 = vsel %vm2018, %v2008, 2102212464
    %v2021 = vsel %vm2017, %v2005, %v2020
    %v2022 = vsel %vm2016, %v2019, %v2021
    %v2023 = vsel %vm2015, %v2002, %v2005
    %v2024 = vsel %vm2018, %v2011, 920167782
    %v2025 = vsel %vm2017, %v2008, %v2024
    %v2026 = vsel %vm2016, %v2023, %v2025
    %v2027 = vsel %vm2015, %v2005, %v2008
    %v2028 = vsel %vm2018, %v2014, 1326507024
    %v2029 = vsel %vm2017, %v2011, %v2028
    %v2030 = vsel %vm2016, %v2027, %v2029
    %v2031 = vshll.u32 %v1991, 8
    %v2032 = vmul.u32.u64.compose %v2031, %v2030
    %v2033 = vextract.low.u32 %v2032
    %v2034 = vextract.high.u32 %v2032
    %v2035 = vmul.u32.u64.compose %v2031, %v2026
    %v2036 = vextract.low.u32 %v2035
    %v2037 = vextract.high.u32 %v2035
    %v2038 = vmul.u32 %v2031, %v2022
    %v2039 = vadd.s32 %v2034, %v2036
    %vm2040 = vc.u32 %v2034, %v2036
    %v2041 = vadd.s32 %v2037, 1
    %v2042 = vsel %vm2040, %v2041, %v2037
    %v2043 = vadd.s32 %v2038, %v2042
    %v2044 = vadd.s32 %v2043, 536870912
    %v2045 = vshrl.u32 %v2044, 30
    %v2046 = vshll.u32 %v2045, 30
    %v2047 = vsub.s32 %v2043, %v2046
    %vm2048 = vcmp.lt.s32.totalorder %v2047, 0
    %v2049 = vsub.s32 0, %v2047
    %v2050 = vsel %vm2048, %v2049, %v2047
    %v2051 = vclz %v2050
    %v2052 = vsub.s32 %v2051, 2
    %vm2053 = vcmp.gt.s32.totalorder 0, %v2052
    %v2054 = vsel %vm2053, 0, %v2052
    %v2055 = vsub.s32 32, %v2054
    %v2056 = vshll.u32 %v2047, %v2054
    %v2057 = vshrl.u32 %v2039, %v2055
    %v2058 = vor.u32 %v2056, %v2057
    %v2059 = vsub.s32 4294967266, %v2054
    %v2060 = vadd.s32 %v2059, 127
    %v2061 = vshll.u32 %v2060, 23
    %v2062 = vor.u32 4788187, %v2061
    %v2063 = vand.u32 2147483647, %v2062
    %v2065 = vcvt.s32.f32 %v2058
    %v2066 = vmul.f32 %v2065, %v2063
    %v2067 = vxor.u32 %v2066, 2147483648
    %v2068 = vsel %vm1985, %v2067, %v2066
    %v2069 = vsub.s32 4, %v2045
    %v2070 = vsel %vm1985, %v2069, %v2045
    %v2071 = vsel %vm1984, %v1876, %v2068
    %v2072 = vsel %vm1984, 0, %v2070
    %v2073 = vcosq.f32.pop %v2071
    %v2074 = vsinq.f32.pop %v2071
    %vm2075 = vweird.f32 %v1876
    %v2076 = vand.u32 %v2072, 3
    %vm2077 = vcmp.lt.s32.totalorder %v2076, 2
    %vm2078 = vcmp.eq.s32.totalorder %v2076, 0
    %v2079 = vxor.u32 %v2074, 2147483648
    %v2080 = vsel %vm2078, %v2073, %v2079
    %vm2081 = vcmp.eq.s32.totalorder %v2076, 2
    %v2082 = vxor.u32 %v2073, 2147483648
    %v2083 = vsel %vm2081, %v2082, %v2074
    %v2084 = vsel %vm2077, %v2080, %v2083
    %v2085 = vsel %vm2075, nan, %v2084
    %v2086 = vmul.f32 %v2085, 0.055555556
    %v2087 = vadd.f32 %v1864, %v2086
    %2088 = vset.pattern.permute.xlu0 9
    %2089 = vperm.xlu0 %2088, %v65
    %v2090 = vpop.permute.xlu0 %2089
    %v2092 = vmul.f32 %v2090, %v75
    %2093 = vset.pattern.permute.xlu0 9
    %2094 = vperm.xlu0 %2093, %v66
    %v2095 = vpop.permute.xlu0 %2094
    %v2097 = vmul.f32 %v2095, %v85
    %v2098 = vadd.f32 %v2092, %v2097
    %v2099 = vadd.f32 %v2098, %v91
    %v2100 = vand.u32 2147483647, %v2099
    %vm2101 = vcmp.le.f32.partialorder %v2100, 0.7853982
    %vm2102 = vcmp.lt.s32.totalorder %v2099, 0
    %v2103 = vand.u32 %v2099, 2139095040
    %v2104 = vshrl.u32 %v2103, 23
    %v2105 = vsub.s32 %v2104, 127
    %v2106 = vand.u32 2147483647, %v2099
    %v2107 = vand.u32 %v2106, 8388607
    %v2108 = vor.u32 %v2107, 8388608
    %v2109 = vsub.s32 0, %v2108
    %v2110 = vadd.s32 %v2105, 1
    %vm2111 = vcmp.gt.s32.totalorder %v2110, 0
    %v2112 = vsel %vm2111, %v2110, 0
    %v2113 = vshrl.u32 %v2112, 5
    %v2114 = vand.u32 %v2112, 31
    %v2115 = vsub.s32 32, %v2114
    %v2116 = vshrl.u32 683565275, %v2115
    %v2117 = vshll.u32 683565275, %v2114
    %v2118 = vshrl.u32 2475754826, %v2115
    %v2119 = vor.u32 %v2117, %v2118
    %v2120 = vshll.u32 2475754826, %v2114
    %v2121 = vshrl.u32 2131351028, %v2115
    %v2122 = vor.u32 %v2120, %v2121
    %v2123 = vshll.u32 2131351028, %v2114
    %v2124 = vshrl.u32 2102212464, %v2115
    %v2125 = vor.u32 %v2123, %v2124
    %v2126 = vshll.u32 2102212464, %v2114
    %v2127 = vshrl.u32 920167782, %v2115
    %v2128 = vor.u32 %v2126, %v2127
    %v2129 = vshll.u32 920167782, %v2114
    %v2130 = vshrl.u32 1326507024, %v2115
    %v2131 = vor.u32 %v2129, %v2130
    %vm2132 = vcmp.lt.s32.totalorder %v2113, 1
    %vm2133 = vcmp.lt.s32.totalorder %v2113, 2
    %vm2134 = vcmp.lt.s32.totalorder %v2113, 3
    %vm2135 = vcmp.lt.s32.totalorder %v2113, 4
    %v2136 = vsel %vm2132, %v2116, %v2119
    %v2137 = vsel %vm2135, %v2125, 2102212464
    %v2138 = vsel %vm2134, %v2122, %v2137
    %v2139 = vsel %vm2133, %v2136, %v2138
    %v2140 = vsel %vm2132, %v2119, %v2122
    %v2141 = vsel %vm2135, %v2128, 920167782
    %v2142 = vsel %vm2134, %v2125, %v2141
    %v2143 = vsel %vm2133, %v2140, %v2142
    %v2144 = vsel %vm2132, %v2122, %v2125
    %v2145 = vsel %vm2135, %v2131, 1326507024
    %v2146 = vsel %vm2134, %v2128, %v2145
    %v2147 = vsel %vm2133, %v2144, %v2146
    %v2148 = vshll.u32 %v2108, 8
    %v2149 = vmul.u32.u64.compose %v2148, %v2147
    %v2150 = vextract.low.u32 %v2149
    %v2151 = vextract.high.u32 %v2149
    %v2152 = vmul.u32.u64.compose %v2148, %v2143
    %v2153 = vextract.low.u32 %v2152
    %v2154 = vextract.high.u32 %v2152
    %v2155 = vmul.u32 %v2148, %v2139
    %v2156 = vadd.s32 %v2151, %v2153
    %vm2157 = vc.u32 %v2151, %v2153
    %v2158 = vadd.s32 %v2154, 1
    %v2159 = vsel %vm2157, %v2158, %v2154
    %v2160 = vadd.s32 %v2155, %v2159
    %v2161 = vadd.s32 %v2160, 536870912
    %v2162 = vshrl.u32 %v2161, 30
    %v2163 = vshll.u32 %v2162, 30
    %v2164 = vsub.s32 %v2160, %v2163
    %vm2165 = vcmp.lt.s32.totalorder %v2164, 0
    %v2166 = vsub.s32 0, %v2164
    %v2167 = vsel %vm2165, %v2166, %v2164
    %v2168 = vclz %v2167
    %v2169 = vsub.s32 %v2168, 2
    %vm2170 = vcmp.gt.s32.totalorder 0, %v2169
    %v2171 = vsel %vm2170, 0, %v2169
    %v2172 = vsub.s32 32, %v2171
    %v2173 = vshll.u32 %v2164, %v2171
    %v2174 = vshrl.u32 %v2156, %v2172
    %v2175 = vor.u32 %v2173, %v2174
    %v2176 = vsub.s32 4294967266, %v2171
    %v2177 = vadd.s32 %v2176, 127
    %v2178 = vshll.u32 %v2177, 23
    %v2179 = vor.u32 4788187, %v2178
    %v2180 = vand.u32 2147483647, %v2179
    %v2182 = vcvt.s32.f32 %v2175
    %v2183 = vmul.f32 %v2182, %v2180
    %v2184 = vxor.u32 %v2183, 2147483648
    %v2185 = vsel %vm2102, %v2184, %v2183
    %v2186 = vsub.s32 4, %v2162
    %v2187 = vsel %vm2102, %v2186, %v2162
    %v2188 = vsel %vm2101, %v2099, %v2185
    %v2189 = vsel %vm2101, 0, %v2187
    %v2190 = vcosq.f32.pop %v2188
    %v2191 = vsinq.f32.pop %v2188
    %vm2192 = vweird.f32 %v2099
    %v2193 = vadd.s32 %v2189, 3
    %v2194 = vand.u32 %v2193, 3
    %vm2195 = vcmp.lt.s32.totalorder %v2194, 2
    %vm2196 = vcmp.eq.s32.totalorder %v2194, 0
    %v2197 = vxor.u32 %v2191, 2147483648
    %v2198 = vsel %vm2196, %v2190, %v2197
    %vm2199 = vcmp.eq.s32.totalorder %v2194, 2
    %v2200 = vxor.u32 %v2190, 2147483648
    %v2201 = vsel %vm2199, %v2200, %v2191
    %v2202 = vsel %vm2195, %v2198, %v2201
    %v2203 = vsel %vm2192, nan, %v2202
    %v2204 = vmul.f32 %v2203, 0.055555556
    %v2205 = vadd.f32 %v1982, %v2204
    %v2206 = vand.u32 2147483647, %v2099
    %vm2207 = vcmp.le.f32.partialorder %v2206, 0.7853982
    %vm2208 = vcmp.lt.s32.totalorder %v2099, 0
    %v2209 = vand.u32 %v2099, 2139095040
    %v2210 = vshrl.u32 %v2209, 23
    %v2211 = vsub.s32 %v2210, 127
    %v2212 = vand.u32 2147483647, %v2099
    %v2213 = vand.u32 %v2212, 8388607
    %v2214 = vor.u32 %v2213, 8388608
    %v2215 = vsub.s32 0, %v2214
    %v2216 = vadd.s32 %v2211, 1
    %vm2217 = vcmp.gt.s32.totalorder %v2216, 0
    %v2218 = vsel %vm2217, %v2216, 0
    %v2219 = vshrl.u32 %v2218, 5
    %v2220 = vand.u32 %v2218, 31
    %v2221 = vsub.s32 32, %v2220
    %v2222 = vshrl.u32 683565275, %v2221
    %v2223 = vshll.u32 683565275, %v2220
    %v2224 = vshrl.u32 2475754826, %v2221
    %v2225 = vor.u32 %v2223, %v2224
    %v2226 = vshll.u32 2475754826, %v2220
    %v2227 = vshrl.u32 2131351028, %v2221
    %v2228 = vor.u32 %v2226, %v2227
    %v2229 = vshll.u32 2131351028, %v2220
    %v2230 = vshrl.u32 2102212464, %v2221
    %v2231 = vor.u32 %v2229, %v2230
    %v2232 = vshll.u32 2102212464, %v2220
    %v2233 = vshrl.u32 920167782, %v2221
    %v2234 = vor.u32 %v2232, %v2233
    %v2235 = vshll.u32 920167782, %v2220
    %v2236 = vshrl.u32 1326507024, %v2221
    %v2237 = vor.u32 %v2235, %v2236
    %vm2238 = vcmp.lt.s32.totalorder %v2219, 1
    %vm2239 = vcmp.lt.s32.totalorder %v2219, 2
    %vm2240 = vcmp.lt.s32.totalorder %v2219, 3
    %vm2241 = vcmp.lt.s32.totalorder %v2219, 4
    %v2242 = vsel %vm2238, %v2222, %v2225
    %v2243 = vsel %vm2241, %v2231, 2102212464
    %v2244 = vsel %vm2240, %v2228, %v2243
    %v2245 = vsel %vm2239, %v2242, %v2244
    %v2246 = vsel %vm2238, %v2225, %v2228
    %v2247 = vsel %vm2241, %v2234, 920167782
    %v2248 = vsel %vm2240, %v2231, %v2247
    %v2249 = vsel %vm2239, %v2246, %v2248
    %v2250 = vsel %vm2238, %v2228, %v2231
    %v2251 = vsel %vm2241, %v2237, 1326507024
    %v2252 = vsel %vm2240, %v2234, %v2251
    %v2253 = vsel %vm2239, %v2250, %v2252
    %v2254 = vshll.u32 %v2214, 8
    %v2255 = vmul.u32.u64.compose %v2254, %v2253
    %v2256 = vextract.low.u32 %v2255
    %v2257 = vextract.high.u32 %v2255
    %v2258 = vmul.u32.u64.compose %v2254, %v2249
    %v2259 = vextract.low.u32 %v2258
    %v2260 = vextract.high.u32 %v2258
    %v2261 = vmul.u32 %v2254, %v2245
    %v2262 = vadd.s32 %v2257, %v2259
    %vm2263 = vc.u32 %v2257, %v2259
    %v2264 = vadd.s32 %v2260, 1
    %v2265 = vsel %vm2263, %v2264, %v2260
    %v2266 = vadd.s32 %v2261, %v2265
    %v2267 = vadd.s32 %v2266, 536870912
    %v2268 = vshrl.u32 %v2267, 30
    %v2269 = vshll.u32 %v2268, 30
    %v2270 = vsub.s32 %v2266, %v2269
    %vm2271 = vcmp.lt.s32.totalorder %v2270, 0
    %v2272 = vsub.s32 0, %v2270
    %v2273 = vsel %vm2271, %v2272, %v2270
    %v2274 = vclz %v2273
    %v2275 = vsub.s32 %v2274, 2
    %vm2276 = vcmp.gt.s32.totalorder 0, %v2275
    %v2277 = vsel %vm2276, 0, %v2275
    %v2278 = vsub.s32 32, %v2277
    %v2279 = vshll.u32 %v2270, %v2277
    %v2280 = vshrl.u32 %v2262, %v2278
    %v2281 = vor.u32 %v2279, %v2280
    %v2282 = vsub.s32 4294967266, %v2277
    %v2283 = vadd.s32 %v2282, 127
    %v2284 = vshll.u32 %v2283, 23
    %v2285 = vor.u32 4788187, %v2284
    %v2286 = vand.u32 2147483647, %v2285
    %v2288 = vcvt.s32.f32 %v2281
    %v2289 = vmul.f32 %v2288, %v2286
    %v2290 = vxor.u32 %v2289, 2147483648
    %v2291 = vsel %vm2208, %v2290, %v2289
    %v2292 = vsub.s32 4, %v2268
    %v2293 = vsel %vm2208, %v2292, %v2268
    %v2294 = vsel %vm2207, %v2099, %v2291
    %v2295 = vsel %vm2207, 0, %v2293
    %v2296 = vcosq.f32.pop %v2294
    %v2297 = vsinq.f32.pop %v2294
    %vm2298 = vweird.f32 %v2099
    %v2299 = vand.u32 %v2295, 3
    %vm2300 = vcmp.lt.s32.totalorder %v2299, 2
    %vm2301 = vcmp.eq.s32.totalorder %v2299, 0
    %v2302 = vxor.u32 %v2297, 2147483648
    %v2303 = vsel %vm2301, %v2296, %v2302
    %vm2304 = vcmp.eq.s32.totalorder %v2299, 2
    %v2305 = vxor.u32 %v2296, 2147483648
    %v2306 = vsel %vm2304, %v2305, %v2297
    %v2307 = vsel %vm2300, %v2303, %v2306
    %v2308 = vsel %vm2298, nan, %v2307
    %v2309 = vmul.f32 %v2308, 0.055555556
    %v2310 = vadd.f32 %v2087, %v2309
    %v2311 = vld [vmem:[#allocation7] sm:$0xff]
    %vm2312 = vcmp.eq.s32.totalorder %v2311, 4294967295
    %v2313 = vsel %vm2312, 1.0, 0.0
    %vm2314 = vcmask 64512
    %v2315 = vsel %vm2314, %v2313, 0.0
    %2316 = vadd.xlane.f32.xlu0 %v2315
    %v2317 = vpop.xlane.xlu0 %2316
    %vm2318 = vcmp.eq.s32.totalorder %v2311, 1
    %v2319 = vsel %vm2318, 1.0, 0.0
    %v2320 = vsel %vm2314, %v2319, 0.0
    %2321 = vadd.xlane.f32.xlu0 %v2320
    %v2322 = vpop.xlane.xlu0 %2321
    %vm2323 = vcmp.eq.s32.totalorder %v2311, 0
    %v2324 = vsel %vm2323, 1.0, 0.0
    %v2325 = vsel %vm2314, %v2324, 0.0
    %2326 = vadd.xlane.f32.xlu0 %v2325
    %v2327 = vpop.xlane.xlu0 %2326
    %v2328 = vld [vmem:[%s4] sm:$0x1]
    %v2329 = vlaneseq
    %v2330 = vshrl.u32 %v2329, 7
    %v2331 = vsub.s32 0, %v2330
    %v2332 = vrot.slane %v2328, %v2331
    %v2333 = vmul.f32 %v2317, %v2332
    %v2334 = vld [vmem:[%s4 + $0x1] sm:$0x1]
    %v2335 = vlaneseq
    %v2336 = vshrl.u32 %v2335, 7
    %v2337 = vsub.s32 0, %v2336
    %v2338 = vrot.slane %v2334, %v2337
    %v2339 = vmul.f32 %v2322, %v2338
    %v2340 = vadd.f32 %v2333, %v2339
    %v2341 = vld [vmem:[%s4 + $0x2] sm:$0x1]
    %v2342 = vlaneseq
    %v2343 = vshrl.u32 %v2342, 7
    %v2344 = vsub.s32 0, %v2343
    %v2345 = vrot.slane %v2341, %v2344
    %v2346 = vmul.f32 %v2327, %v2345
    %v2347 = vadd.f32 %v2340, %v2346
    %v2348 = vld [vmem:[%s4 + $0x3] sm:$0x1]
    %v2349 = vlaneseq
    %v2350 = vshrl.u32 %v2349, 7
    %v2351 = vsub.s32 0, %v2350
    %v2352 = vrot.slane %v2348, %v2351
    %v2353 = vadd.f32 %v2347, %v2352
    %v2354 = vld [vmem:[%s5] sm:$0x1]
    %v2355 = vlaneseq
    %v2356 = vshrl.u32 %v2355, 7
    %v2357 = vsub.s32 0, %v2356
    %v2358 = vrot.slane %v2354, %v2357
    %v2359 = vmul.f32 %v2317, %v2358
    %v2360 = vld [vmem:[%s5 + $0x1] sm:$0x1]
    %v2361 = vlaneseq
    %v2362 = vshrl.u32 %v2361, 7
    %v2363 = vsub.s32 0, %v2362
    %v2364 = vrot.slane %v2360, %v2363
    %v2365 = vmul.f32 %v2322, %v2364
    %v2366 = vadd.f32 %v2359, %v2365
    %v2367 = vld [vmem:[%s5 + $0x2] sm:$0x1]
    %v2368 = vlaneseq
    %v2369 = vshrl.u32 %v2368, 7
    %v2370 = vsub.s32 0, %v2369
    %v2371 = vrot.slane %v2367, %v2370
    %v2372 = vmul.f32 %v2327, %v2371
    %v2373 = vadd.f32 %v2366, %v2372
    %v2374 = vld [vmem:[%s5 + $0x3] sm:$0x1]
    %v2375 = vlaneseq
    %v2376 = vshrl.u32 %v2375, 7
    %v2377 = vsub.s32 0, %v2376
    %v2378 = vrot.slane %v2374, %v2377
    %v2379 = vadd.f32 %v2373, %v2378
    %v2380 = vadd.f32 %v2205, %v2353
    %vm2381 = vcmask 130048
    %2382 = vst.msk [vmem:[#allocation8] sm:$0xff] %vm2381, %v2380
    %v2383 = vadd.f32 %v2310, %v2379
    %2384 = vst.msk [vmem:[#allocation9] sm:$0xff] %vm2381, %v2383
    // Predicated region
    $region38: #{tpu_custom_call.1} parent=1 // pred_check
      _
    $region39: #{tpu_custom_call.1} parent=1 // pred_check_branch
      %2386 = sbr.rel (0) target = $region41
    $region40: #{tpu_custom_call.1} parent=1 // pred_region
      %s2388 = ssub.s32 128, 128
      %2389 = vsyncadd [#allocation4], %s2388
      %s2391 = sshll.u32 [#allocation8], 4
      %s2392 = int_to_ptr.vmem [resolvable:$true] %s2391
      %2394 = dma.vmem_to_hbm [thread:$0]  %s2392, 128, %s6, [#allocation4]
    $region41: #{tpu_custom_call.1} parent=1 // pred_fallthru
      _
    // Predicated region
    $region42: #{tpu_custom_call.1} parent=1 // pred_check
      _
    $region43: #{tpu_custom_call.1} parent=1 // pred_check_branch
      %2396 = sbr.rel (0) target = $region45
    $region44: #{tpu_custom_call.1} parent=1 // pred_region
      %s2398 = ssub.s32 128, 128
      %2399 = vsyncadd [#allocation10], %s2398
      %s2401 = sshll.u32 [#allocation9], 4
      %s2402 = int_to_ptr.vmem [resolvable:$true] %s2401
      %2404 = dma.vmem_to_hbm [thread:$0]  %s2402, 128, %s7, [#allocation10]
    $region45: #{tpu_custom_call.1} parent=1 // pred_fallthru
      _
    // Predicated region
    $region46: #{tpu_custom_call.1} parent=1 // pred_check
      _
    $region47: #{tpu_custom_call.1} parent=1 // pred_check_branch
      %2406 = sbr.rel (0) target = $region49
    $region48: #{tpu_custom_call.1} parent=1 // pred_region
      %2407 = dma.done [#allocation4], 128
    $region49: #{tpu_custom_call.1} parent=1 // pred_fallthru
      _
    // Predicated region
    $region50: #{tpu_custom_call.1} parent=1 // pred_check
      _
    $region51: #{tpu_custom_call.1} parent=1 // pred_check_branch
      %2409 = sbr.rel (0) target = $region53
    $region52: #{tpu_custom_call.1} parent=1 // pred_region
      %2410 = dma.done [#allocation10], 128
    $region53: #{tpu_custom_call.1} parent=1 // pred_fallthru
      _
    %2411 = vsyncpa [#allocation3], 1
    %2412 = vsyncpa [#allocation6], 1
    %2413 = vsyncpa [#allocation4], 1
    %2414 = vsyncpa [#allocation10], 1

</llo_original>
